<compile_context>
chip_gen: v7x
topology: tpu7x:2x2x1
jax: 0.10.0
libtpu: 0.0.40
codegen_flags: <defaults>
</compile_context>

<pallas_src>
import functools

import jax
import jax.numpy as jnp
from jax import lax
from jax.experimental import pallas as pl
from jax.experimental.pallas import tpu as pltpu


def _build_banded_weights(w_oihw, w_sp, dtype):
    """Fold horizontal taps + SAME zero padding of a 3x3 conv into per-ky banded RHS.

    w_oihw: (Cout, Cin, 3, 3) conv weight (BN scale already folded in).
    Returns rw of shape (3, w_sp*Cin, w_sp*Cout) with
        rw[ky, x'*Cin + i, x*Cout + o] = w_oihw[o, i, ky, x' - x + 1]  if |x' - x| <= 1
                                         0                              otherwise
    so that  dot(slab[ky:ky+H, :], rw[ky])  summed over ky equals the SAME-padded conv
    in the lane-dense (rows=H, lanes=W*C) layout.
    """
    cout, cin = w_oihw.shape[0], w_oihw.shape[1]
    mats = []
    for ky in range(3):
        r = jnp.zeros((w_sp * cin, w_sp * cout), jnp.float32)
        for kx in range(3):
            tap = jnp.transpose(w_oihw[:, :, ky, kx]).astype(jnp.float32)   # (Cin, Cout)
            band = jnp.eye(w_sp, w_sp, k=1 - kx, dtype=jnp.float32)         # [x', x]
            r = r + jnp.einsum("pq,io->piqo", band, tap).reshape(w_sp * cin, w_sp * cout)
        mats.append(r)
    return jnp.stack(mats).astype(dtype)


def _maxpool2x2(y, h, w, c):
    """2x2 / stride-2 max pool. y: (h, w*c) lane-dense -> (h//2, (w//2)*c)."""
    yr = y.reshape(h // 2, 2 * w * c)
    rows = jnp.maximum(yr[:, : w * c], yr[:, w * c:])            # pool over H
    rc = rows.reshape(h // 2, w // 2, 2 * c)
    pooled = jnp.maximum(rc[:, :, :c], rc[:, :, c:])             # pool over W
    return pooled.reshape(h // 2, (w // 2) * c)


def _fused_kernel(x_ref, rw1_ref, b1_ref, rw2_ref, b2_ref, o_ref,
                  pad1, pad2, *, NB, H, W, Cin, C1, C2):
    """Fused ShallowCNN forward for NB images, fully lane-dense.

    x_ref : (NB, H, W*Cin)             input slab(s)
    rw1_ref: (3, W*Cin, W*C1)          stage-1 banded weights (taps+pad+BN scale folded)
    b1_ref: (1, W*C1)                  stage-1 folded BN bias tiled over W (f32)
    rw2_ref: (3, W2*C1, W2*C2)         stage-2 banded weights
    b2_ref: (1, W2*C2)                 stage-2 folded BN bias tiled over W2 (f32)
    o_ref : (NB, H4, W4*C2)            lane-dense output slab(s)
    pad1  : VMEM (H+2, W*Cin)          row-padded stage-1 input (zero top/bottom rows)
    pad2  : VMEM (H2+2, W2*C1)         row-padded stage-2 input
    """
    H2, W2 = H // 2, W // 2

    # Zero only the 1-pixel top/bottom border rows (left/right padding is folded into
    # the banded weights; the interior is fully overwritten for every image below).
    pad1[0:1, :] = jnp.zeros((1, W * Cin), pad1.dtype)
    pad1[H + 1:H + 2, :] = jnp.zeros((1, W * Cin), pad1.dtype)
    pad2[0:1, :] = jnp.zeros((1, W2 * C1), pad2.dtype)
    pad2[H2 + 1:H2 + 2, :] = jnp.zeros((1, W2 * C1), pad2.dtype)

    def conv_bn_relu_pool(pad_ref, rw_ref, b_ref, h, w, cout):
        acc = jnp.zeros((h, w * cout), jnp.float32)
        for ky in range(3):                                   # 3 MXU calls per stage
            acc = acc + jnp.dot(pad_ref[ky:ky + h, :], rw_ref[ky],
                                preferred_element_type=jnp.float32)
        y = jnp.maximum(acc + b_ref[...], 0.0)                # folded-BN bias + ReLU (f32)
        return _maxpool2x2(y, h, w, cout)                     # (h//2, (w//2)*cout) f32

    for b in range(NB):                                       # unrolled image loop
        # ---- stage 1: pad -> conv1 + BN + ReLU -> pool ----
        pad1[1:H + 1, :] = x_ref[b]
        p1 = conv_bn_relu_pool(pad1, rw1_ref, b1_ref, H, W, C1)     # (H2, W2*C1) f32

        # ---- stage 2: intermediate never leaves VMEM ----
        pad2[1:H2 + 1, :] = p1.astype(pad2.dtype)
        p2 = conv_bn_relu_pool(pad2, rw2_ref, b2_ref, H2, W2, C2)   # (H4, W4*C2) f32

        o_ref[b] = p2.astype(o_ref.dtype)                     # lane-dense store


def _est_vmem_bytes(entries):
    """Rough VMEM footprint estimate (lane pad to 128, sublane pad to 8)."""
    total = 0
    for shape, dtype in entries:
        s = list(shape)
        s[-1] = -(-s[-1] // 128) * 128
        if len(s) >= 2:
            s[-2] = -(-s[-2] // 8) * 8
        n = 1
        for d in s:
            n *= d
        total += n * jnp.dtype(dtype).itemsize
    return total


def shallow_cnn_forward(x_nhwc, w1_folded, bias1, w2_folded, bias2, *,
                        compute_dtype=jnp.float32, images_per_step=None):
    """Fused ShallowCNN forward on NHWC input.

    x_nhwc   : (N, H, W, Cin)
    w1_folded: (C1, Cin, 3, 3)  conv1 OIHW weights with BN scale folded in
    bias1    : (C1,)            folded BN bias
    w2_folded: (C2, C1, 3, 3)
    bias2    : (C2,)
    returns  : (N, H//4, W//4, C2) float32
    """
    N, H, W, Cin = x_nhwc.shape
    assert H % 4 == 0 and W % 4 == 0, (H, W)
    C1, C2 = w1_folded.shape[0], w2_folded.shape[0]
    H2, W2, H4, W4 = H // 2, W // 2, H // 4, W // 4

    # Banded weights (taps + SAME padding + BN scale folded); bias tiled over W.
    rw1 = _build_banded_weights(w1_folded, W, compute_dtype)        # (3, W*Cin, W*C1)
    rw2 = _build_banded_weights(w2_folded, W2, compute_dtype)       # (3, W2*C1, W2*C2)
    b1 = jnp.tile(bias1.astype(jnp.float32), W).reshape(1, W * C1)
    b2 = jnp.tile(bias2.astype(jnp.float32), W2).reshape(1, W2 * C2)

    # Lane-dense input slab: one contiguous (H, W*Cin) copy per image.
    x = x_nhwc.astype(compute_dtype).reshape(N, H, W * Cin)

    # Images per grid step: amortize per-step overhead but keep grid length >= 2
    # so v7x's two TensorCores both get work.
    if images_per_step is None:
        nb = N // 2 if (N >= 4 and N % 2 == 0) else 1
    else:
        nb = images_per_step
    assert nb >= 1 and N % nb == 0, (N, nb)

    est = _est_vmem_bytes(
        [((nb, H, W * Cin), compute_dtype)] * 2            # double-buffered input block
        + [((3, W * Cin, W * C1), compute_dtype)] * 2
        + [((3, W2 * C1, W2 * C2), compute_dtype)] * 2
        + [((1, W * C1), jnp.float32)] * 2
        + [((1, W2 * C2), jnp.float32)] * 2
        + [((nb, H4, W4 * C2), jnp.float32)] * 2            # double-buffered output block
        + [((H + 2, W * Cin), compute_dtype),
           ((H2 + 2, W2 * C1), compute_dtype)])
    vmem_limit = int(min(64 << 20, max(32 << 20, 2 * est + (2 << 20))))

    kernel = functools.partial(_fused_kernel, NB=nb, H=H, W=W, Cin=Cin, C1=C1, C2=C2)
    out = pl.pallas_call(
        kernel,
        out_shape=jax.ShapeDtypeStruct((N, H4, W4 * C2), jnp.float32),
        grid_spec=pltpu.PrefetchScalarGridSpec(
            num_scalar_prefetch=0,
            grid=(N // nb,),
            in_specs=[
                pl.BlockSpec((nb, H, W * Cin), lambda n: (n, 0, 0)),
                pl.BlockSpec((3, W * Cin, W * C1), lambda n: (0, 0, 0)),
                pl.BlockSpec((1, W * C1), lambda n: (0, 0)),
                pl.BlockSpec((3, W2 * C1, W2 * C2), lambda n: (0, 0, 0)),
                pl.BlockSpec((1, W2 * C2), lambda n: (0, 0)),
            ],
            out_specs=pl.BlockSpec((nb, H4, W4 * C2), lambda n: (n, 0, 0)),
            scratch_shapes=[
                pltpu.VMEM((H + 2, W * Cin), compute_dtype),      # row-padded stage-1 in
                pltpu.VMEM((H2 + 2, W2 * C1), compute_dtype),     # row-padded stage-2 in
            ],
        ),
        compiler_params=pltpu.CompilerParams(
            dimension_semantics=("parallel",),
            vmem_limit_bytes=vmem_limit),
    )(x, rw1, b1, rw2, b2)
    return out.reshape(N, H4, W4, C2)


class ShallowCNNPallas:
    """ShallowCNN with deterministic synthetic parameters (eval-mode BN, folded)."""

    def __init__(self, input_channels=3, hidden_dim=32, key=None):
        assert isinstance(input_channels, int) and isinstance(hidden_dim, int)
        c1, c2 = hidden_dim // 2, hidden_dim
        eps = 1e-5
        k1, k2, k3, k4, k5, k6 = jax.random.split(key, 6)

        # Conv weights, PyTorch OIHW layout, bias=False.
        self.w1 = 0.1 * jax.random.normal(k1, (c1, input_channels, 3, 3), jnp.float32)
        self.w2 = 0.1 * jax.random.normal(k2, (c2, c1, 3, 3), jnp.float32)

        # BatchNorm parameters (running_mean=0, running_var=1 as at __init__;
        # gamma/beta drawn deterministically so the BN path stays non-trivial).
        g1 = 1.0 + 0.1 * jax.random.normal(k3, (c1,), jnp.float32)
        be1 = 0.1 * jax.random.normal(k4, (c1,), jnp.float32)
        g2 = 1.0 + 0.1 * jax.random.normal(k5, (c2,), jnp.float32)
        be2 = 0.1 * jax.random.normal(k6, (c2,), jnp.float32)
        m1 = jnp.zeros((c1,), jnp.float32)
        v1 = jnp.ones((c1,), jnp.float32)
        m2 = jnp.zeros((c2,), jnp.float32)
        v2 = jnp.ones((c2,), jnp.float32)

        # Fold BN (eval mode): y = conv(x) * scale + bias
        self.scale1 = g1 / jnp.sqrt(v1 + eps)
        self.bias1 = be1 - m1 * self.scale1
        self.scale2 = g2 / jnp.sqrt(v2 + eps)
        self.bias2 = be2 - m2 * self.scale2

        # BN scale folded into conv weights (OIHW kept; banded RHS built per call).
        self.w1_folded = self.w1 * self.scale1[:, None, None, None]
        self.w2_folded = self.w2 * self.scale2[:, None, None, None]

    def __call__(self, x_nchw, compute_dtype=jnp.float32):
        x = jnp.transpose(x_nchw, (0, 2, 3, 1))                      # NCHW -> NHWC
        y = shallow_cnn_forward(x, self.w1_folded, self.bias1,
                                self.w2_folded, self.bias2,
                                compute_dtype=compute_dtype)
        return jnp.transpose(y, (0, 3, 1, 2))                        # NHWC -> NCHW


def _ref_forward(x_nchw, w1, scale1, bias1, w2, scale2, bias2):
    """Pure-JAX reference (NCHW) for correctness checking."""
    def stage(x, w, s, b):
        y = lax.conv_general_dilated(x, w, window_strides=(1, 1), padding="SAME",
                                     dimension_numbers=("NCHW", "OIHW", "NCHW"))
        y = y * s[None, :, None, None] + b[None, :, None, None]
        y = jnp.maximum(y, 0.0)
        y = lax.reduce_window(y, -jnp.inf, lax.max,
                              window_dimensions=(1, 1, 2, 2),
                              window_strides=(1, 1, 2, 2), padding="VALID")
        return y
    x = stage(x_nchw, w1, scale1, bias1)
    x = stage(x, w2, scale2, bias2)
    return x


if __name__ == "__main__":
    key = jax.random.PRNGKey(0)
    kx, kp = jax.random.split(key)

    N, Cin, H, W = 2, 3, 16, 16
    hidden_dim = 32

    x = jax.random.normal(kx, (N, Cin, H, W), jnp.float32)
    model = ShallowCNNPallas(input_channels=Cin, hidden_dim=hidden_dim, key=kp)

    ref = _ref_forward(x, model.w1, model.scale1, model.bias1,
                       model.w2, model.scale2, model.bias2)

    # f32 path: exact check.
    out = jax.block_until_ready(model(x, compute_dtype=jnp.float32))
    assert out.shape == (N, hidden_dim, H // 4, W // 4), out.shape
    assert bool(jnp.allclose(out, ref, atol=2e-4, rtol=2e-4)), \
        float(jnp.max(jnp.abs(out - ref)))

    # bf16 MXU-operand path (v6e/v7x peak); f32 accumulation/epilogue -> loose tolerance.
    out_bf16 = jax.block_until_ready(model(x, compute_dtype=jnp.bfloat16))
    assert bool(jnp.allclose(out_bf16, ref, atol=1e-1, rtol=5e-2)), \
        float(jnp.max(jnp.abs(out_bf16 - ref)))

    print("KERNEL_OK")
</pallas_src>

<mosaic_0001>
module attributes {stable_mosaic.version = 11 : i64} {
  func.func @_fused_kernel(%arg0: i32, %arg1: memref<1x16x48xf32, #tpu.memory_space<vmem>>, %arg2: memref<3x48x256xf32, #tpu.memory_space<vmem>>, %arg3: memref<1x256xf32, #tpu.memory_space<vmem>>, %arg4: memref<3x128x256xf32, #tpu.memory_space<vmem>>, %arg5: memref<1x256xf32, #tpu.memory_space<vmem>>, %arg6: memref<1x4x128xf32, #tpu.memory_space<vmem>>, %arg7: memref<18x48xf32, #tpu.memory_space<vmem>>, %arg8: memref<10x128xf32, #tpu.memory_space<vmem>>) attributes {dimension_semantics = [#tpu.dimension_semantics<parallel>], iteration_bounds = array<i64: 2>, scalar_prefetch = 0 : i64, scratch_operands = 2 : i64, tpu.core_type = #tpu.core_type<tc>, window_params = [{transform_indices = @transform_0, window_bounds = array<i64: 1, 16, 48>}, {pipeline_mode = #tpu.pipeline_mode<synchronous>, transform_indices = @transform_1, window_bounds = array<i64: 3, 48, 256>}, {pipeline_mode = #tpu.pipeline_mode<synchronous>, transform_indices = @transform_2, window_bounds = array<i64: 1, 256>}, {pipeline_mode = #tpu.pipeline_mode<synchronous>, transform_indices = @transform_3, window_bounds = array<i64: 3, 128, 256>}, {pipeline_mode = #tpu.pipeline_mode<synchronous>, transform_indices = @transform_4, window_bounds = array<i64: 1, 256>}, {transform_indices = @transform_5, window_bounds = array<i64: 1, 4, 128>}]} {
    %cst = arith.constant 0.000000e+00 : f32
    %0 = vector.broadcast %cst : f32 to vector<1x48xf32>
    %c0 = arith.constant 0 : index
    %c0_0 = arith.constant 0 : index
    %1 = vector.load %arg7[%c0, %c0_0] : memref<18x48xf32, #tpu.memory_space<vmem>>, vector<1x48xf32>
    tpu.vector_store %arg7[%c0, %c0_0], %0 {strides = array<i32>} : memref<18x48xf32, #tpu.memory_space<vmem>>, vector<1x48xf32>,
    %cst_1 = arith.constant 0.000000e+00 : f32
    %2 = vector.broadcast %cst_1 : f32 to vector<1x48xf32>
    %c17 = arith.constant 17 : index
    %c0_2 = arith.constant 0 : index
    %3 = vector.load %arg7[%c17, %c0_2] : memref<18x48xf32, #tpu.memory_space<vmem>>, vector<1x48xf32>
    tpu.vector_store %arg7[%c17, %c0_2], %2 {strides = array<i32>} : memref<18x48xf32, #tpu.memory_space<vmem>>, vector<1x48xf32>,
    %cst_3 = arith.constant 0.000000e+00 : f32
    %4 = vector.broadcast %cst_3 : f32 to vector<1x128xf32>
    %c0_4 = arith.constant 0 : index
    %c0_5 = arith.constant 0 : index
    %5 = vector.load %arg8[%c0_4, %c0_5] : memref<10x128xf32, #tpu.memory_space<vmem>>, vector<1x128xf32>
    tpu.vector_store %arg8[%c0_4, %c0_5], %4 {strides = array<i32>} : memref<10x128xf32, #tpu.memory_space<vmem>>, vector<1x128xf32>,
    %cst_6 = arith.constant 0.000000e+00 : f32
    %6 = vector.broadcast %cst_6 : f32 to vector<1x128xf32>
    %c9 = arith.constant 9 : index
    %c0_7 = arith.constant 0 : index
    %7 = vector.load %arg8[%c9, %c0_7] : memref<10x128xf32, #tpu.memory_space<vmem>>, vector<1x128xf32>
    tpu.vector_store %arg8[%c9, %c0_7], %6 {strides = array<i32>} : memref<10x128xf32, #tpu.memory_space<vmem>>, vector<1x128xf32>,
    %c0_8 = arith.constant 0 : index
    %c0_9 = arith.constant 0 : index
    %c0_10 = arith.constant 0 : index
    %8 = vector.load %arg1[%c0_8, %c0_9, %c0_10] : memref<1x16x48xf32, #tpu.memory_space<vmem>>, vector<1x16x48xf32>
    %9 = vector.shape_cast %8 : vector<1x16x48xf32> to vector<16x48xf32>
    %c1 = arith.constant 1 : index
    %c0_11 = arith.constant 0 : index
    %10 = vector.load %arg7[%c1, %c0_11] : memref<18x48xf32, #tpu.memory_space<vmem>>, vector<16x48xf32>
    tpu.vector_store %arg7[%c1, %c0_11], %9 {strides = array<i32>} : memref<18x48xf32, #tpu.memory_space<vmem>>, vector<16x48xf32>,
    %cst_12 = arith.constant 0.000000e+00 : f32
    %11 = vector.broadcast %cst_12 : f32 to vector<16x256xf32>
    %c0_13 = arith.constant 0 : index
    %c0_14 = arith.constant 0 : index
    %12 = vector.load %arg7[%c0_13, %c0_14] : memref<18x48xf32, #tpu.memory_space<vmem>>, vector<16x48xf32>
    %c0_15 = arith.constant 0 : index
    %c0_16 = arith.constant 0 : index
    %c0_17 = arith.constant 0 : index
    %13 = vector.load %arg2[%c0_15, %c0_16, %c0_17] : memref<3x48x256xf32, #tpu.memory_space<vmem>>, vector<1x48x256xf32>
    %14 = vector.shape_cast %13 : vector<1x48x256xf32> to vector<48x256xf32>
    %cst_18 = arith.constant dense<0.000000e+00> : vector<16x256xf32>
    %15 = tpu.matmul %12, %14, %cst_18 {dimension_numbers = #tpu.dot_dimension_numbers<[1], [0], [0], [1], [0, 0, 1, 1], [], []>} : vector<16x48xf32>, vector<48x256xf32>, vector<16x256xf32> -> vector<16x256xf32>
    %16 = arith.addf %11, %15 : vector<16x256xf32>
    %c1_19 = arith.constant 1 : index
    %c0_20 = arith.constant 0 : index
    %17 = vector.load %arg7[%c1_19, %c0_20] : memref<18x48xf32, #tpu.memory_space<vmem>>, vector<16x48xf32>
    %c1_21 = arith.constant 1 : index
    %c0_22 = arith.constant 0 : index
    %c0_23 = arith.constant 0 : index
    %18 = vector.load %arg2[%c1_21, %c0_22, %c0_23] : memref<3x48x256xf32, #tpu.memory_space<vmem>>, vector<1x48x256xf32>
    %19 = vector.shape_cast %18 : vector<1x48x256xf32> to vector<48x256xf32>
    %cst_24 = arith.constant dense<0.000000e+00> : vector<16x256xf32>
    %20 = tpu.matmul %17, %19, %cst_24 {dimension_numbers = #tpu.dot_dimension_numbers<[1], [0], [0], [1], [0, 0, 1, 1], [], []>} : vector<16x48xf32>, vector<48x256xf32>, vector<16x256xf32> -> vector<16x256xf32>
    %21 = arith.addf %16, %20 : vector<16x256xf32>
    %c2 = arith.constant 2 : index
    %c0_25 = arith.constant 0 : index
    %22 = vector.load %arg7[%c2, %c0_25] : memref<18x48xf32, #tpu.memory_space<vmem>>, vector<16x48xf32>
    %c2_26 = arith.constant 2 : index
    %c0_27 = arith.constant 0 : index
    %c0_28 = arith.constant 0 : index
    %23 = vector.load %arg2[%c2_26, %c0_27, %c0_28] : memref<3x48x256xf32, #tpu.memory_space<vmem>>, vector<1x48x256xf32>
    %24 = vector.shape_cast %23 : vector<1x48x256xf32> to vector<48x256xf32>
    %cst_29 = arith.constant dense<0.000000e+00> : vector<16x256xf32>
    %25 = tpu.matmul %22, %24, %cst_29 {dimension_numbers = #tpu.dot_dimension_numbers<[1], [0], [0], [1], [0, 0, 1, 1], [], []>} : vector<16x48xf32>, vector<48x256xf32>, vector<16x256xf32> -> vector<16x256xf32>
    %26 = arith.addf %21, %25 : vector<16x256xf32>
    %c0_30 = arith.constant 0 : index
    %c0_31 = arith.constant 0 : index
    %27 = vector.load %arg3[%c0_30, %c0_31] : memref<1x256xf32, #tpu.memory_space<vmem>>, vector<1x256xf32>
    %28 = vector.broadcast %27 : vector<1x256xf32> to vector<16x256xf32>
    %29 = arith.addf %26, %28 : vector<16x256xf32>
    %cst_32 = arith.constant 0.000000e+00 : f32
    %30 = vector.broadcast %cst_32 : f32 to vector<16x256xf32>
    %31 = arith.maximumf %29, %30 : vector<16x256xf32>
    %32 = vector.shape_cast %31 : vector<16x256xf32> to vector<8x512xf32>
    %33 = vector.extract_strided_slice %32 {offsets = [0, 0], sizes = [8, 256], strides = [1, 1]} : vector<8x512xf32> to vector<8x256xf32>
    %34 = vector.extract_strided_slice %32 {offsets = [0, 256], sizes = [8, 256], strides = [1, 1]} : vector<8x512xf32> to vector<8x256xf32>
    %35 = arith.maximumf %33, %34 : vector<8x256xf32>
    %36 = vector.shape_cast %35 : vector<8x256xf32> to vector<8x8x32xf32>
    %37 = vector.extract_strided_slice %36 {offsets = [0, 0, 0], sizes = [8, 8, 16], strides = [1, 1, 1]} : vector<8x8x32xf32> to vector<8x8x16xf32>
    %38 = vector.extract_strided_slice %36 {offsets = [0, 0, 16], sizes = [8, 8, 16], strides = [1, 1, 1]} : vector<8x8x32xf32> to vector<8x8x16xf32>
    %39 = arith.maximumf %37, %38 : vector<8x8x16xf32>
    %40 = vector.shape_cast %39 : vector<8x8x16xf32> to vector<8x128xf32>
    %c1_33 = arith.constant 1 : index
    %c0_34 = arith.constant 0 : index
    %41 = vector.load %arg8[%c1_33, %c0_34] : memref<10x128xf32, #tpu.memory_space<vmem>>, vector<8x128xf32>
    tpu.vector_store %arg8[%c1_33, %c0_34], %40 {strides = array<i32>} : memref<10x128xf32, #tpu.memory_space<vmem>>, vector<8x128xf32>,
    %cst_35 = arith.constant 0.000000e+00 : f32
    %42 = vector.broadcast %cst_35 : f32 to vector<8x256xf32>
    %c0_36 = arith.constant 0 : index
    %c0_37 = arith.constant 0 : index
    %43 = vector.load %arg8[%c0_36, %c0_37] : memref<10x128xf32, #tpu.memory_space<vmem>>, vector<8x128xf32>
    %c0_38 = arith.constant 0 : index
    %c0_39 = arith.constant 0 : index
    %c0_40 = arith.constant 0 : index
    %44 = vector.load %arg4[%c0_38, %c0_39, %c0_40] : memref<3x128x256xf32, #tpu.memory_space<vmem>>, vector<1x128x256xf32>
    %45 = vector.shape_cast %44 : vector<1x128x256xf32> to vector<128x256xf32>
    %cst_41 = arith.constant dense<0.000000e+00> : vector<8x256xf32>
    %46 = tpu.matmul %43, %45, %cst_41 {dimension_numbers = #tpu.dot_dimension_numbers<[1], [0], [0], [1], [0, 0, 1, 1], [], []>} : vector<8x128xf32>, vector<128x256xf32>, vector<8x256xf32> -> vector<8x256xf32>
    %47 = arith.addf %42, %46 : vector<8x256xf32>
    %c1_42 = arith.constant 1 : index
    %c0_43 = arith.constant 0 : index
    %48 = vector.load %arg8[%c1_42, %c0_43] : memref<10x128xf32, #tpu.memory_space<vmem>>, vector<8x128xf32>
    %c1_44 = arith.constant 1 : index
    %c0_45 = arith.constant 0 : index
    %c0_46 = arith.constant 0 : index
    %49 = vector.load %arg4[%c1_44, %c0_45, %c0_46] : memref<3x128x256xf32, #tpu.memory_space<vmem>>, vector<1x128x256xf32>
    %50 = vector.shape_cast %49 : vector<1x128x256xf32> to vector<128x256xf32>
    %cst_47 = arith.constant dense<0.000000e+00> : vector<8x256xf32>
    %51 = tpu.matmul %48, %50, %cst_47 {dimension_numbers = #tpu.dot_dimension_numbers<[1], [0], [0], [1], [0, 0, 1, 1], [], []>} : vector<8x128xf32>, vector<128x256xf32>, vector<8x256xf32> -> vector<8x256xf32>
    %52 = arith.addf %47, %51 : vector<8x256xf32>
    %c2_48 = arith.constant 2 : index
    %c0_49 = arith.constant 0 : index
    %53 = vector.load %arg8[%c2_48, %c0_49] : memref<10x128xf32, #tpu.memory_space<vmem>>, vector<8x128xf32>
    %c2_50 = arith.constant 2 : index
    %c0_51 = arith.constant 0 : index
    %c0_52 = arith.constant 0 : index
    %54 = vector.load %arg4[%c2_50, %c0_51, %c0_52] : memref<3x128x256xf32, #tpu.memory_space<vmem>>, vector<1x128x256xf32>
    %55 = vector.shape_cast %54 : vector<1x128x256xf32> to vector<128x256xf32>
    %cst_53 = arith.constant dense<0.000000e+00> : vector<8x256xf32>
    %56 = tpu.matmul %53, %55, %cst_53 {dimension_numbers = #tpu.dot_dimension_numbers<[1], [0], [0], [1], [0, 0, 1, 1], [], []>} : vector<8x128xf32>, vector<128x256xf32>, vector<8x256xf32> -> vector<8x256xf32>
    %57 = arith.addf %52, %56 : vector<8x256xf32>
    %c0_54 = arith.constant 0 : index
    %c0_55 = arith.constant 0 : index
    %58 = vector.load %arg5[%c0_54, %c0_55] : memref<1x256xf32, #tpu.memory_space<vmem>>, vector<1x256xf32>
    %59 = vector.broadcast %58 : vector<1x256xf32> to vector<8x256xf32>
    %60 = arith.addf %57, %59 : vector<8x256xf32>
    %cst_56 = arith.constant 0.000000e+00 : f32
    %61 = vector.broadcast %cst_56 : f32 to vector<8x256xf32>
    %62 = arith.maximumf %60, %61 : vector<8x256xf32>
    %63 = vector.shape_cast %62 : vector<8x256xf32> to vector<4x512xf32>
    %64 = vector.extract_strided_slice %63 {offsets = [0, 0], sizes = [4, 256], strides = [1, 1]} : vector<4x512xf32> to vector<4x256xf32>
    %65 = vector.extract_strided_slice %63 {offsets = [0, 256], sizes = [4, 256], strides = [1, 1]} : vector<4x512xf32> to vector<4x256xf32>
    %66 = arith.maximumf %64, %65 : vector<4x256xf32>
    %67 = vector.shape_cast %66 : vector<4x256xf32> to vector<4x4x64xf32>
    %68 = vector.extract_strided_slice %67 {offsets = [0, 0, 0], sizes = [4, 4, 32], strides = [1, 1, 1]} : vector<4x4x64xf32> to vector<4x4x32xf32>
    %69 = vector.extract_strided_slice %67 {offsets = [0, 0, 32], sizes = [4, 4, 32], strides = [1, 1, 1]} : vector<4x4x64xf32> to vector<4x4x32xf32>
    %70 = arith.maximumf %68, %69 : vector<4x4x32xf32>
    %71 = vector.shape_cast %70 : vector<4x4x32xf32> to vector<4x128xf32>
    %c0_57 = arith.constant 0 : index
    %c0_58 = arith.constant 0 : index
    %c0_59 = arith.constant 0 : index
    %72 = vector.load %arg6[%c0_57, %c0_58, %c0_59] : memref<1x4x128xf32, #tpu.memory_space<vmem>>, vector<1x4x128xf32>
    %73 = vector.shape_cast %72 : vector<1x4x128xf32> to vector<4x128xf32>
    %74 = vector.shape_cast %71 : vector<4x128xf32> to vector<1x4x128xf32>
    tpu.vector_store %arg6[%c0_57, %c0_58, %c0_59], %74 {strides = array<i32>} : memref<1x4x128xf32, #tpu.memory_space<vmem>>, vector<1x4x128xf32>,
    return
  }
  func.func @transform_0(%arg0: i32) -> (i32, i32, i32) {
    %c0_i32 = arith.constant 0 : i32
    %c0_i32_0 = arith.constant 0 : i32
    %c0_i32_1 = arith.constant 0 : i32
    return %arg0, %c0_i32, %c0_i32_0 : i32, i32, i32
  }
  func.func @transform_1(%arg0: i32) -> (i32, i32, i32) {
    %c0_i32 = arith.constant 0 : i32
    %c0_i32_0 = arith.constant 0 : i32
    %c0_i32_1 = arith.constant 0 : i32
    %c0_i32_2 = arith.constant 0 : i32
    return %c0_i32, %c0_i32_0, %c0_i32_1 : i32, i32, i32
  }
  func.func @transform_2(%arg0: i32) -> (i32, i32) {
    %c0_i32 = arith.constant 0 : i32
    %c0_i32_0 = arith.constant 0 : i32
    %c0_i32_1 = arith.constant 0 : i32
    return %c0_i32, %c0_i32_0 : i32, i32
  }
  func.func @transform_3(%arg0: i32) -> (i32, i32, i32) {
    %c0_i32 = arith.constant 0 : i32
    %c0_i32_0 = arith.constant 0 : i32
    %c0_i32_1 = arith.constant 0 : i32
    %c0_i32_2 = arith.constant 0 : i32
    return %c0_i32, %c0_i32_0, %c0_i32_1 : i32, i32, i32
  }
  func.func @transform_4(%arg0: i32) -> (i32, i32) {
    %c0_i32 = arith.constant 0 : i32
    %c0_i32_0 = arith.constant 0 : i32
    %c0_i32_1 = arith.constant 0 : i32
    return %c0_i32, %c0_i32_0 : i32, i32
  }
  func.func @transform_5(%arg0: i32) -> (i32, i32, i32) {
    %c0_i32 = arith.constant 0 : i32
    %c0_i32_0 = arith.constant 0 : i32
    %c0_i32_1 = arith.constant 0 : i32
    return %arg0, %c0_i32, %c0_i32_0 : i32, i32, i32
  }
}

</mosaic_0001>

<llo_original>
// kernel: tpu_custom_call.1
$region0: #{tpu_custom_call.1}
  #allocation0 [shape = 'u32[]', space=smem, size = 0x4, offset = 0x4, fixed_abs, tag = 'smem constant byte address 0x4 - core index']
  #allocation1 [shape = 'u32[144,128]{1,0:T(1,128)}', space=vmem, size = 0x12000, scoped, tag = 'internal scratch']
  #allocation2 [shape = 'f32[18,48]{1,0:T(8,128)}', space=vmem, size = 0x3000, scoped, tag = 'scratch operand']
  #allocation3 [shape = 'f32[10,128]{1,0:T(8,128)}', space=vmem, size = 0x2000, scoped, tag = 'scratch operand']
  %s0 = inlined_call_operand.hbm [shape: f32[2,16,48], index: 0, kind: input, shape index: {}]
  %s1 = inlined_call_operand.hbm [shape: f32[3,48,256], index: 1, kind: input, shape index: {}]
  %s2 = inlined_call_operand.vmem [shape: f32[1,256], index: 2, kind: input, shape index: {}]
  %s3 = inlined_call_operand.hbm [shape: f32[3,128,256], index: 3, kind: input, shape index: {}]
  %s4 = inlined_call_operand.vmem [shape: f32[1,256], index: 4, kind: input, shape index: {}]
  %s5 = inlined_call_operand.hbm [shape: f32[2,4,128], index: 5, kind: output, shape index: {}]
  %s6 = sld [smem:[#allocation0]]
  $region65: #{tpu_custom_call.1} parent=0
    _
  %s8 = ssub.s32 1, %s6
  %s9 = scalar_select 0, %s8, %s6
  $region1: #{tpu_custom_call.1} parent=0
    #allocation4 [shape = 'u8[16384]{0}', space=vmem, size = 0x4000, scoped, tag = 'input window, operand 0']
    #allocation5 [shape = 's32[2]{0}', space=sflag, size = 0x8, scoped, tag = 'scoped memory for tpu_custom_call.1']
    #allocation6 [shape = 's32[2]{0}', space=sflag, size = 0x8, scoped, tag = 'scoped memory for tpu_custom_call.1']
    #allocation7 [shape = 'u8[147456]{0}', space=vmem, size = 0x24000, scoped, tag = 'input window, operand 1, single buffered']
    #allocation8 [shape = 's32[1]{0}', space=sflag, size = 0x4, scoped, tag = 'scoped memory for tpu_custom_call.1']
    #allocation9 [shape = 'u8[393216]{0}', space=vmem, size = 0x60000, scoped, tag = 'input window, operand 3, single buffered']
    #allocation10 [shape = 'u8[4096]{0}', space=vmem, size = 0x1000, scoped, tag = 'output window, operand 0']
    %10 = vsyncpa [#allocation5], 0
    %s11 = scalar_lea.sflag [#allocation5], 1
    %12 = vsyncpa %s11, 0
    %13 = vsyncpa [#allocation8], 0
    %14 = vsyncpa [#allocation6], 0
    %s15 = scalar_lea.sflag [#allocation6], 1
    %16 = vsyncpa %s15, 0
    loop: start=0, step=1, limit=4
    $region2: #{tpu_custom_call.1} parent=1 // loop_pre_header
      _
    $region3: #{tpu_custom_call.1} parent=1 // loop_header
      %s18 = sphi 0, %s22
      %p19 = scmp.ge.s32.totalorder %s18, 4
      %s28 = sphi 0, %s30
      %s31 = sphi 0, %s28
      %s32 = sphi 0, %s31
      %s48 = sphi 0, %s32
      %s52 = sphi 0, %s52
      %s54 = sphi 0, %s52
      %s55 = sphi 0, %s54
      %s69 = sphi 0, %s55
      %s73 = sphi 0, %s73
      %s75 = sphi 0, %s73
      %s76 = sphi 0, %s75
      %s90 = sphi 0, %s76
      %s94 = sphi 0, %s94
      %s96 = sphi 0, %s94
      %s97 = sphi 0, %s96
      %s111 = sphi 0, %s97
      %s115 = sphi 0, %s115
      %s117 = sphi 0, %s115
      %s118 = sphi 0, %s117
      %s132 = sphi 0, %s118
      %s138 = sphi 0, %s140
      %s141 = sphi 0, %s138
      %s142 = sphi 0, %s141
      %s158 = sphi 0, %s142
    $region4: #{tpu_custom_call.1} parent=1 // loop_header_branch
      %21 = sbr.rel (%p19) target = $region8
    $region5: #{tpu_custom_call.1} parent=1 // loop_body
      %s23 = ssub.s32 %s18, 1
      %s24 = ssub.s32 %s18, 2
      %s25 = sadd.s32 %s18, 1
      %s26 = ssub.s32 %s18, %s25
      %p27 = scmp.eq.s32.totalorder %s26, 0
      %s29 = sadd.s32 %s28, 1
      %s30 = scalar_select %p27, %s28, %s29
      %p33 = pneg %p27
      %p34 = scmp.eq.s32.totalorder %s18, 1
      %p35 = por %p33, %p34
      %p36 = scmp.ne.s32.totalorder %s28, %s31
      %p37 = scmp.eq.s32.totalorder %s18, 0
      %p38 = por %p36, %p37
      %p39 = scmp.ne.s32.totalorder %s28, %s31
      %p40 = scmp.eq.s32.totalorder %s23, 1
      %p41 = por %p39, %p40
      %p42 = scmp.ne.s32.totalorder %s31, %s32
      %p43 = scmp.eq.s32.totalorder %s23, 0
      %p44 = por %p42, %p43
      %p45 = scmp.ne.s32.totalorder %s31, %s32
      %p46 = scmp.eq.s32.totalorder %s24, 1
      %p47 = por %p45, %p46
      %p49 = scmp.ne.s32.totalorder %s32, %s48
      %p50 = scmp.eq.s32.totalorder %s24, 0
      %p51 = por %p49, %p50
      %s53 = sadd.s32 %s52, 1
      %p56 = scmp.eq.s32.totalorder %s18, 1
      %p57 = scmp.ne.s32.totalorder %s52, %s54
      %p58 = scmp.eq.s32.totalorder %s18, 0
      %p59 = por %p57, %p58
      %p60 = scmp.ne.s32.totalorder %s52, %s54
      %p61 = scmp.eq.s32.totalorder %s23, 1
      %p62 = por %p60, %p61
      %p63 = scmp.ne.s32.totalorder %s54, %s55
      %p64 = scmp.eq.s32.totalorder %s23, 0
      %p65 = por %p63, %p64
      %p66 = scmp.ne.s32.totalorder %s54, %s55
      %p67 = scmp.eq.s32.totalorder %s24, 1
      %p68 = por %p66, %p67
      %p70 = scmp.ne.s32.totalorder %s55, %s69
      %p71 = scmp.eq.s32.totalorder %s24, 0
      %p72 = por %p70, %p71
      %s74 = sadd.s32 %s73, 1
      %p77 = scmp.eq.s32.totalorder %s18, 1
      %p78 = scmp.ne.s32.totalorder %s73, %s75
      %p79 = scmp.eq.s32.totalorder %s18, 0
      %p80 = por %p78, %p79
      %p81 = scmp.ne.s32.totalorder %s73, %s75
      %p82 = scmp.eq.s32.totalorder %s23, 1
      %p83 = por %p81, %p82
      %p84 = scmp.ne.s32.totalorder %s75, %s76
      %p85 = scmp.eq.s32.totalorder %s23, 0
      %p86 = por %p84, %p85
      %p87 = scmp.ne.s32.totalorder %s75, %s76
      %p88 = scmp.eq.s32.totalorder %s24, 1
      %p89 = por %p87, %p88
      %p91 = scmp.ne.s32.totalorder %s76, %s90
      %p92 = scmp.eq.s32.totalorder %s24, 0
      %p93 = por %p91, %p92
      %s95 = sadd.s32 %s94, 1
      %p98 = scmp.eq.s32.totalorder %s18, 1
      %p99 = scmp.ne.s32.totalorder %s94, %s96
      %p100 = scmp.eq.s32.totalorder %s18, 0
      %p101 = por %p99, %p100
      %p102 = scmp.ne.s32.totalorder %s94, %s96
      %p103 = scmp.eq.s32.totalorder %s23, 1
      %p104 = por %p102, %p103
      %p105 = scmp.ne.s32.totalorder %s96, %s97
      %p106 = scmp.eq.s32.totalorder %s23, 0
      %p107 = por %p105, %p106
      %p108 = scmp.ne.s32.totalorder %s96, %s97
      %p109 = scmp.eq.s32.totalorder %s24, 1
      %p110 = por %p108, %p109
      %p112 = scmp.ne.s32.totalorder %s97, %s111
      %p113 = scmp.eq.s32.totalorder %s24, 0
      %p114 = por %p112, %p113
      %s116 = sadd.s32 %s115, 1
      %p119 = scmp.eq.s32.totalorder %s18, 1
      %p120 = scmp.ne.s32.totalorder %s115, %s117
      %p121 = scmp.eq.s32.totalorder %s18, 0
      %p122 = por %p120, %p121
      %p123 = scmp.ne.s32.totalorder %s115, %s117
      %p124 = scmp.eq.s32.totalorder %s23, 1
      %p125 = por %p123, %p124
      %p126 = scmp.ne.s32.totalorder %s117, %s118
      %p127 = scmp.eq.s32.totalorder %s23, 0
      %p128 = por %p126, %p127
      %p129 = scmp.ne.s32.totalorder %s117, %s118
      %p130 = scmp.eq.s32.totalorder %s24, 1
      %p131 = por %p129, %p130
      %p133 = scmp.ne.s32.totalorder %s118, %s132
      %p134 = scmp.eq.s32.totalorder %s24, 0
      %p135 = por %p133, %p134
      %s136 = ssub.s32 %s18, %s25
      %p137 = scmp.eq.s32.totalorder %s136, 0
      %s139 = sadd.s32 %s138, 1
      %s140 = scalar_select %p137, %s138, %s139
      %p143 = pneg %p137
      %p144 = scmp.eq.s32.totalorder %s18, 1
      %p145 = por %p143, %p144
      %p146 = scmp.ne.s32.totalorder %s138, %s141
      %p147 = scmp.eq.s32.totalorder %s18, 0
      %p148 = por %p146, %p147
      %p149 = scmp.ne.s32.totalorder %s138, %s141
      %p150 = scmp.eq.s32.totalorder %s23, 1
      %p151 = por %p149, %p150
      %p152 = scmp.ne.s32.totalorder %s141, %s142
      %p153 = scmp.eq.s32.totalorder %s23, 0
      %p154 = por %p152, %p153
      %p155 = scmp.ne.s32.totalorder %s141, %s142
      %p156 = scmp.eq.s32.totalorder %s24, 1
      %p157 = por %p155, %p156
      %p159 = scmp.ne.s32.totalorder %s142, %s158
      %p160 = scmp.eq.s32.totalorder %s24, 0
      %p161 = por %p159, %p160
      %p162 = scmp.le.s32.totalorder 1, %s18
      %p163 = scmp.lt.s32.totalorder %s18, 3
      %p164 = pnand %p162, %p163
      %p165 = pneg %p164
      // Predicated region
      $region9: #{tpu_custom_call.1} parent=5 // pred_check
        _
      $region10: #{tpu_custom_call.1} parent=5 // pred_check_branch
        %167 = sbr.rel (%p164) target = $region12
      $region11: #{tpu_custom_call.1} parent=5 // pred_region
        %s168 = ssub.s32 %s18, 1
        // Predicated region
        $region13: #{tpu_custom_call.1} parent=11 // pred_check
          %p169 = pneg %p65
        $region14: #{tpu_custom_call.1} parent=11 // pred_check_branch
          %171 = sbr.rel (%p169) target = $region16
        $region15: #{tpu_custom_call.1} parent=11 // pred_region
          %s173 = ssub.s32 4608, 4608
          %174 = vsyncadd [#allocation8], %s173
          %s175 = sshll.u32 [#allocation7], 4
          %s176 = int_to_ptr.vmem [resolvable:$true] %s175
          %181 = dma.hbm_to_vmem [thread:$0]  %s1, 4608, %s176, [#allocation8], 256, 256, 16
        $region16: #{tpu_custom_call.1} parent=11 // pred_fallthru
          _
        // Predicated region
        $region17: #{tpu_custom_call.1} parent=11 // pred_check
          %p182 = pneg %p86
        $region18: #{tpu_custom_call.1} parent=11 // pred_check_branch
          %184 = sbr.rel (%p182) target = $region20
        $region19: #{tpu_custom_call.1} parent=11 // pred_region
          _
        $region20: #{tpu_custom_call.1} parent=11 // pred_fallthru
          _
        // Predicated region
        $region21: #{tpu_custom_call.1} parent=11 // pred_check
          %p185 = pneg %p107
        $region22: #{tpu_custom_call.1} parent=11 // pred_check_branch
          %187 = sbr.rel (%p185) target = $region24
        $region23: #{tpu_custom_call.1} parent=11 // pred_region
          %s189 = ssub.s32 12288, 12288
          %190 = vsyncadd [#allocation8], %s189
          %s191 = sshll.u32 [#allocation9], 4
          %s192 = int_to_ptr.vmem [resolvable:$true] %s191
          %197 = dma.hbm_to_vmem [thread:$0]  %s3, 12288, %s192, [#allocation8], 256, 256, 16
        $region24: #{tpu_custom_call.1} parent=11 // pred_fallthru
          _
        // Predicated region
        $region25: #{tpu_custom_call.1} parent=11 // pred_check
          %p198 = pneg %p128
        $region26: #{tpu_custom_call.1} parent=11 // pred_check_branch
          %200 = sbr.rel (%p198) target = $region28
        $region27: #{tpu_custom_call.1} parent=11 // pred_region
          _
        $region28: #{tpu_custom_call.1} parent=11 // pred_fallthru
          _
      $region12: #{tpu_custom_call.1} parent=5 // pred_fallthru
        _
      %p201 = scmp.lt.s32.totalorder %s18, 2
      // Predicated region
      $region29: #{tpu_custom_call.1} parent=5 // pred_check
        %p202 = pneg %p201
      $region30: #{tpu_custom_call.1} parent=5 // pred_check_branch
        %204 = sbr.rel (%p202) target = $region32
      $region31: #{tpu_custom_call.1} parent=5 // pred_region
        // Predicated region
        $region33: #{tpu_custom_call.1} parent=31 // pred_check
          %p205 = pneg %p38
        $region34: #{tpu_custom_call.1} parent=31 // pred_check_branch
          %207 = sbr.rel (%p205) target = $region36
        $region35: #{tpu_custom_call.1} parent=31 // pred_region
          %s208 = sand.u32 %s28, 1
          %s209 = scalar_lea.sflag [#allocation5], %s208
          %s210 = sand.u32 %s28, 1
          %s211 = smul.addr %s210, 16
          %s212 = scalar_lea.vmem [#allocation4], %s211
          %s214 = ssub.s32 256, 256
          %215 = vsyncadd %s209, %s214
          %s216 = smul.addr %s18, 2
          %s217 = smul.addr %s216, 128
          %s218 = scalar_lea.hbm %s0, %s217
          %s219 = sshll.u32 %s212, 4
          %s220 = int_to_ptr.vmem [resolvable:$true] %s219
          %225 = dma.hbm_to_vmem [thread:$0]  %s218, 256, %s220, %s209, 128, 128, 8
        $region36: #{tpu_custom_call.1} parent=31 // pred_fallthru
          _
      $region32: #{tpu_custom_call.1} parent=5 // pred_fallthru
        _
      %p226 = scmp.le.s32.totalorder 1, %s18
      %p227 = scmp.lt.s32.totalorder %s18, 3
      %p228 = pnand %p226, %p227
      %p229 = pneg %p228
      // Predicated region
      $region37: #{tpu_custom_call.1} parent=5 // pred_check
        _
      $region38: #{tpu_custom_call.1} parent=5 // pred_check_branch
        %231 = sbr.rel (%p228) target = $region40
      $region39: #{tpu_custom_call.1} parent=5 // pred_region
        %s232 = ssub.s32 %s18, 1
        %s233 = sand.u32 %s31, 1
        %s234 = scalar_lea.sflag [#allocation5], %s233
        %s235 = sand.u32 %s31, 1
        %s236 = smul.addr %s235, 16
        %s237 = scalar_lea.vmem [#allocation4], %s236
        // Predicated region
        $region41: #{tpu_custom_call.1} parent=39 // pred_check
          %p238 = pneg %p44
        $region42: #{tpu_custom_call.1} parent=39 // pred_check_branch
          %240 = sbr.rel (%p238) target = $region44
        $region43: #{tpu_custom_call.1} parent=39 // pred_region
          %241 = dma.done %s234, 256
        $region44: #{tpu_custom_call.1} parent=39 // pred_fallthru
          _
        // Predicated region
        $region45: #{tpu_custom_call.1} parent=39 // pred_check
          %p242 = pneg %p65
        $region46: #{tpu_custom_call.1} parent=39 // pred_check_branch
          %244 = sbr.rel (%p242) target = $region48
        $region47: #{tpu_custom_call.1} parent=39 // pred_region
          %245 = dma.done [#allocation8], 4608
        $region48: #{tpu_custom_call.1} parent=39 // pred_fallthru
          _
        // Predicated region
        $region49: #{tpu_custom_call.1} parent=39 // pred_check
          %p246 = pneg %p107
        $region50: #{tpu_custom_call.1} parent=39 // pred_check_branch
          %248 = sbr.rel (%p246) target = $region52
        $region51: #{tpu_custom_call.1} parent=39 // pred_region
          %249 = dma.done [#allocation8], 12288
        $region52: #{tpu_custom_call.1} parent=39 // pred_fallthru
          _
        %s250 = sand.u32 %s31, 1
        %s251 = scalar_lea.sflag [#allocation5], %s250
        %s252 = sand.u32 %s31, 1
        %s253 = smul.addr %s252, 16
        %s254 = scalar_lea.vmem [#allocation4], %s253
        %p255 = pneg %p44
        %p256 = pneg %p41
        %p257 = pneg %p65
        %p258 = pneg %p62
        %p259 = pneg %p86
        %p260 = pneg %p83
        %p261 = pneg %p107
        %p262 = pneg %p104
        %p263 = pneg %p128
        %p264 = pneg %p125
        %p265 = pneg %p154
        %p266 = pneg %p151
        %s267 = sand.u32 %s141, 1
        %s268 = scalar_lea.sflag [#allocation6], %s267
        %s269 = sand.u32 %s141, 1
        %s270 = smul.addr %s269, 4
        %s271 = scalar_lea.vmem [#allocation10], %s270
        %vm272 = vcmask 385024
        %273 = vst.msk [vmem:[#allocation2] sm:$0x1] %vm272, 0.0
        %274 = vst.msk [vmem:[#allocation2 + $0x11] sm:$0x1] %vm272, 0.0
        %275 = vst [vmem:[#allocation3] sm:$0x1] 0.0
        %276 = vst [vmem:[#allocation3 + $0x9] sm:$0x1] 0.0
        %v277 = vld [vmem:[%s237] sm:$0xff]
        %v278 = vld [vmem:[%s237 + $0x8] sm:$0xff]
        %vm279 = vcmask 392192
        %280 = vst.msk [vmem:[#allocation2 + $0x1] sm:$0xff] %vm279, %v277
        %281 = vst.msk [vmem:[#allocation2 + $0x9] sm:$0xff] %vm279, %v278
        %v282 = vld [vmem:[#allocation2] sm:$0xff]
        %v283 = vld [vmem:[#allocation2 + $0x8] sm:$0xff]
        %v284 = vld [vmem:[#allocation7] sm:$0xff]
        %v285 = vld [vmem:[#allocation7 + $0x8] sm:$0xff]
        %v286 = vld [vmem:[#allocation7 + $0x10] sm:$0xff]
        %v287 = vld [vmem:[#allocation7 + $0x18] sm:$0xff]
        %v288 = vld [vmem:[#allocation7 + $0x20] sm:$0xff]
        %v289 = vld [vmem:[#allocation7 + $0x28] sm:$0xff]
        %v290 = vld [vmem:[#allocation7 + $0x30] sm:$0xff]
        %v291 = vld [vmem:[#allocation7 + $0x38] sm:$0xff]
        %v292 = vld [vmem:[#allocation7 + $0x40] sm:$0xff]
        %v293 = vld [vmem:[#allocation7 + $0x48] sm:$0xff]
        %v294 = vld [vmem:[#allocation7 + $0x50] sm:$0xff]
        %v295 = vld [vmem:[#allocation7 + $0x58] sm:$0xff]
        %v296 = vld [vmem:[#allocation2 + $0x1] sm:$0xff]
        %v297 = vld [vmem:[#allocation2 + $0x9] sm:$0xff]
        %s298 = scalar_lea.vmem [#allocation7], 96
        %v299 = vld [vmem:[%s298] sm:$0xff]
        %v300 = vld [vmem:[%s298 + $0x8] sm:$0xff]
        %v301 = vld [vmem:[%s298 + $0x10] sm:$0xff]
        %v302 = vld [vmem:[%s298 + $0x18] sm:$0xff]
        %v303 = vld [vmem:[%s298 + $0x20] sm:$0xff]
        %v304 = vld [vmem:[%s298 + $0x28] sm:$0xff]
        %v305 = vld [vmem:[%s298 + $0x30] sm:$0xff]
        %v306 = vld [vmem:[%s298 + $0x38] sm:$0xff]
        %v307 = vld [vmem:[%s298 + $0x40] sm:$0xff]
        %v308 = vld [vmem:[%s298 + $0x48] sm:$0xff]
        %v309 = vld [vmem:[%s298 + $0x50] sm:$0xff]
        %v310 = vld [vmem:[%s298 + $0x58] sm:$0xff]
        %v312 = vsel %vm279, %v296, 0
        %v315 = vsel %vm279, %v297, 0
        %317 = vmatprep.subr.mxu0 %v300
        %318 = vmatpush1.msra.mxu0 %v299
        %319 = vmatprep.subr.mxu0 %v302
        %320 = vmatpush1.msra.mxu0 %v301
        %321 = vmatprep.subr.mxu0 %v304
        %322 = vmatpush1.msra.mxu0 %v303
        %323 = vmatprep.subr.mxu0 %v306
        %324 = vmatpush1.msra.mxu0 %v305
        %325 = vmatprep.subr.mxu0 %v308
        %326 = vmatpush1.msra.mxu0 %v307
        %327 = vmatprep.subr.mxu0 %v310
        %328 = vmatpush1.msra.mxu0 %v309
        %329 = vmatprep.subr.mxu0 0.0
        %330 = vmatpush1.msra.mxu0 0.0
        %331 = vmatprep.subr.mxu0 0.0
        %332 = vmatpush1.msra.mxu0 0.0
        %333 = vmatprep.subr.mxu0 0.0
        %334 = vmatpush1.msra.mxu0 0.0
        %335 = vmatprep.subr.mxu0 0.0
        %336 = vmatpush1.msra.mxu0 0.0
        %337 = vmatprep.subr.mxu0 0.0
        %338 = vmatpush1.msra.mxu0 0.0
        %339 = vmatprep.subr.mxu0 0.0
        %340 = vmatpush1.msra.mxu0 0.0
        %341 = vmatprep.subr.mxu0 0.0
        %342 = vmatpush1.msra.mxu0 0.0
        %343 = vmatprep.subr.mxu0 0.0
        %344 = vmatpush1.msra.mxu0 0.0
        %345 = vmatprep.subr.mxu0 0.0
        %346 = vmatpush1.msra.mxu0 0.0
        %347 = vmatprep.subr.mxu0 0.0
        %348 = vmatpush1.msra.mxu0 0.0
        %349 = vmatprep.subr.mxu0 0.0
        %350 = vmatpush1.msra.mxu0 0.0
        %351 = vmatprep.subr.mxu0 0.0
        %352 = vmatpush1.msra.mxu0 0.0
        %353 = vmatprep.subr.mxu0 0.0
        %354 = vmatpush1.msra.mxu0 0.0
        %355 = vmatprep.subr.mxu0 0.0
        %356 = vmatpush1.msra.mxu0 0.0
        %357 = vmatprep.subr.mxu0 0.0
        %358 = vmatpush1.msra.mxu0 0.0
        %359 = vmatprep.subr.mxu0 0.0
        %360 = vmatpush1.msra.mxu0 0.0
        %361 = vmatprep.subr.mxu0 0.0
        %362 = vmatpush1.msra.mxu0 0.0
        %363 = vmatprep.subr.mxu0 0.0
        %364 = vmatpush1.msra.mxu0 0.0
        %365 = vmatprep.subr.mxu0 0.0
        %366 = vmatpush1.msra.mxu0 0.0
        %367 = vmatprep.subr.mxu0 0.0
        %368 = vmatpush1.msra.mxu0 0.0
        %369 = vmatprep.subr.mxu0 0.0
        %370 = vmatpush1.msra.mxu0 0.0
        %371 = vmatprep.subr.mxu0 0.0
        %372 = vmatpush1.msra.mxu0 0.0
        %373 = vmatprep.subr.mxu0 0.0
        %374 = vmatpush1.msra.mxu0 0.0
        %375 = vmatprep.subr.mxu0 0.0
        %376 = vmatpush1.msra.mxu0 0.0
        %377 = vmatprep.subr.mxu0 0.0
        %378 = vmatpush1.msra.mxu0 0.0
        %379 = vmatprep.subr.mxu0 0.0
        %380 = vmatpush1.msra.mxu0 0.0
        %381 = vmatprep.mubr.f32.mxu0 0.0
        %382 = vmatmul.mubr.f32.gmra.mrb[0].mxu0 %v312
        %v383 = vpop.f32.mrb[0].mxu0
        %v384 = vadd.f32 0.0, %v383
        %v385 = vpop.f32.mrb[0].mxu0
        %v386 = vadd.f32 0.0, %v385
        %387 = vmatprep.mubr.f32.mxu0 0.0
        %388 = vmatmul.mubr.f32.gmra.mrb[0].mxu0 %v315
        %v389 = vpop.f32.mrb[0].mxu0
        %v390 = vadd.f32 0.0, %v389
        %v391 = vpop.f32.mrb[0].mxu0
        %v392 = vadd.f32 0.0, %v391
        %393 = vdwg.mxu0
        %v395 = vsel %vm279, %v282, 0
        %v398 = vsel %vm279, %v283, 0
        %400 = vmatprep.subr.mxu0 %v285
        %401 = vmatpush1.msra.mxu0 %v284
        %402 = vmatprep.subr.mxu0 %v287
        %403 = vmatpush1.msra.mxu0 %v286
        %404 = vmatprep.subr.mxu0 %v289
        %405 = vmatpush1.msra.mxu0 %v288
        %406 = vmatprep.subr.mxu0 %v291
        %407 = vmatpush1.msra.mxu0 %v290
        %408 = vmatprep.subr.mxu0 %v293
        %409 = vmatpush1.msra.mxu0 %v292
        %410 = vmatprep.subr.mxu0 %v295
        %411 = vmatpush1.msra.mxu0 %v294
        %412 = vmatprep.subr.mxu0 0.0
        %413 = vmatpush1.msra.mxu0 0.0
        %414 = vmatprep.subr.mxu0 0.0
        %415 = vmatpush1.msra.mxu0 0.0
        %416 = vmatprep.subr.mxu0 0.0
        %417 = vmatpush1.msra.mxu0 0.0
        %418 = vmatprep.subr.mxu0 0.0
        %419 = vmatpush1.msra.mxu0 0.0
        %420 = vmatprep.subr.mxu0 0.0
        %421 = vmatpush1.msra.mxu0 0.0
        %422 = vmatprep.subr.mxu0 0.0
        %423 = vmatpush1.msra.mxu0 0.0
        %424 = vmatprep.subr.mxu0 0.0
        %425 = vmatpush1.msra.mxu0 0.0
        %426 = vmatprep.subr.mxu0 0.0
        %427 = vmatpush1.msra.mxu0 0.0
        %428 = vmatprep.subr.mxu0 0.0
        %429 = vmatpush1.msra.mxu0 0.0
        %430 = vmatprep.subr.mxu0 0.0
        %431 = vmatpush1.msra.mxu0 0.0
        %432 = vmatprep.subr.mxu0 0.0
        %433 = vmatpush1.msra.mxu0 0.0
        %434 = vmatprep.subr.mxu0 0.0
        %435 = vmatpush1.msra.mxu0 0.0
        %436 = vmatprep.subr.mxu0 0.0
        %437 = vmatpush1.msra.mxu0 0.0
        %438 = vmatprep.subr.mxu0 0.0
        %439 = vmatpush1.msra.mxu0 0.0
        %440 = vmatprep.subr.mxu0 0.0
        %441 = vmatpush1.msra.mxu0 0.0
        %442 = vmatprep.subr.mxu0 0.0
        %443 = vmatpush1.msra.mxu0 0.0
        %444 = vmatprep.subr.mxu0 0.0
        %445 = vmatpush1.msra.mxu0 0.0
        %446 = vmatprep.subr.mxu0 0.0
        %447 = vmatpush1.msra.mxu0 0.0
        %448 = vmatprep.subr.mxu0 0.0
        %449 = vmatpush1.msra.mxu0 0.0
        %450 = vmatprep.subr.mxu0 0.0
        %451 = vmatpush1.msra.mxu0 0.0
        %452 = vmatprep.subr.mxu0 0.0
        %453 = vmatpush1.msra.mxu0 0.0
        %454 = vmatprep.subr.mxu0 0.0
        %455 = vmatpush1.msra.mxu0 0.0
        %456 = vmatprep.subr.mxu0 0.0
        %457 = vmatpush1.msra.mxu0 0.0
        %458 = vmatprep.subr.mxu0 0.0
        %459 = vmatpush1.msra.mxu0 0.0
        %460 = vmatprep.subr.mxu0 0.0
        %461 = vmatpush1.msra.mxu0 0.0
        %462 = vmatprep.subr.mxu0 0.0
        %463 = vmatpush1.msra.mxu0 0.0
        %464 = vmatprep.mubr.f32.mxu0 0.0
        %465 = vmatmul.mubr.f32.gmra.mrb[0].mxu0 %v395
        %v466 = vpop.f32.mrb[0].mxu0
        %v467 = vadd.f32 %v384, %v466
        %v468 = vpop.f32.mrb[0].mxu0
        %v469 = vadd.f32 %v386, %v468
        %470 = vmatprep.mubr.f32.mxu0 0.0
        %471 = vmatmul.mubr.f32.gmra.mrb[0].mxu0 %v398
        %v472 = vpop.f32.mrb[0].mxu0
        %v473 = vadd.f32 %v390, %v472
        %v474 = vpop.f32.mrb[0].mxu0
        %v475 = vadd.f32 %v392, %v474
        %476 = vdwg.mxu0
        %v477 = vld [vmem:[#allocation2 + $0x2] sm:$0xff]
        %v478 = vld [vmem:[#allocation2 + $0xa] sm:$0xff]
        %s479 = scalar_lea.vmem [#allocation7], 192
        %v480 = vld [vmem:[%s479] sm:$0xff]
        %v481 = vld [vmem:[%s479 + $0x8] sm:$0xff]
        %v482 = vld [vmem:[%s479 + $0x10] sm:$0xff]
        %v483 = vld [vmem:[%s479 + $0x18] sm:$0xff]
        %v484 = vld [vmem:[%s479 + $0x20] sm:$0xff]
        %v485 = vld [vmem:[%s479 + $0x28] sm:$0xff]
        %v486 = vld [vmem:[%s479 + $0x30] sm:$0xff]
        %v487 = vld [vmem:[%s479 + $0x38] sm:$0xff]
        %v488 = vld [vmem:[%s479 + $0x40] sm:$0xff]
        %v489 = vld [vmem:[%s479 + $0x48] sm:$0xff]
        %v490 = vld [vmem:[%s479 + $0x50] sm:$0xff]
        %v491 = vld [vmem:[%s479 + $0x58] sm:$0xff]
        %v493 = vsel %vm279, %v477, 0
        %v496 = vsel %vm279, %v478, 0
        %498 = vmatprep.subr.mxu0 %v481
        %499 = vmatpush1.msra.mxu0 %v480
        %500 = vmatprep.subr.mxu0 %v483
        %501 = vmatpush1.msra.mxu0 %v482
        %502 = vmatprep.subr.mxu0 %v485
        %503 = vmatpush1.msra.mxu0 %v484
        %504 = vmatprep.subr.mxu0 %v487
        %505 = vmatpush1.msra.mxu0 %v486
        %506 = vmatprep.subr.mxu0 %v489
        %507 = vmatpush1.msra.mxu0 %v488
        %508 = vmatprep.subr.mxu0 %v491
        %509 = vmatpush1.msra.mxu0 %v490
        %510 = vmatprep.subr.mxu0 0.0
        %511 = vmatpush1.msra.mxu0 0.0
        %512 = vmatprep.subr.mxu0 0.0
        %513 = vmatpush1.msra.mxu0 0.0
        %514 = vmatprep.subr.mxu0 0.0
        %515 = vmatpush1.msra.mxu0 0.0
        %516 = vmatprep.subr.mxu0 0.0
        %517 = vmatpush1.msra.mxu0 0.0
        %518 = vmatprep.subr.mxu0 0.0
        %519 = vmatpush1.msra.mxu0 0.0
        %520 = vmatprep.subr.mxu0 0.0
        %521 = vmatpush1.msra.mxu0 0.0
        %522 = vmatprep.subr.mxu0 0.0
        %523 = vmatpush1.msra.mxu0 0.0
        %524 = vmatprep.subr.mxu0 0.0
        %525 = vmatpush1.msra.mxu0 0.0
        %526 = vmatprep.subr.mxu0 0.0
        %527 = vmatpush1.msra.mxu0 0.0
        %528 = vmatprep.subr.mxu0 0.0
        %529 = vmatpush1.msra.mxu0 0.0
        %530 = vmatprep.subr.mxu0 0.0
        %531 = vmatpush1.msra.mxu0 0.0
        %532 = vmatprep.subr.mxu0 0.0
        %533 = vmatpush1.msra.mxu0 0.0
        %534 = vmatprep.subr.mxu0 0.0
        %535 = vmatpush1.msra.mxu0 0.0
        %536 = vmatprep.subr.mxu0 0.0
        %537 = vmatpush1.msra.mxu0 0.0
        %538 = vmatprep.subr.mxu0 0.0
        %539 = vmatpush1.msra.mxu0 0.0
        %540 = vmatprep.subr.mxu0 0.0
        %541 = vmatpush1.msra.mxu0 0.0
        %542 = vmatprep.subr.mxu0 0.0
        %543 = vmatpush1.msra.mxu0 0.0
        %544 = vmatprep.subr.mxu0 0.0
        %545 = vmatpush1.msra.mxu0 0.0
        %546 = vmatprep.subr.mxu0 0.0
        %547 = vmatpush1.msra.mxu0 0.0
        %548 = vmatprep.subr.mxu0 0.0
        %549 = vmatpush1.msra.mxu0 0.0
        %550 = vmatprep.subr.mxu0 0.0
        %551 = vmatpush1.msra.mxu0 0.0
        %552 = vmatprep.subr.mxu0 0.0
        %553 = vmatpush1.msra.mxu0 0.0
        %554 = vmatprep.subr.mxu0 0.0
        %555 = vmatpush1.msra.mxu0 0.0
        %556 = vmatprep.subr.mxu0 0.0
        %557 = vmatpush1.msra.mxu0 0.0
        %558 = vmatprep.subr.mxu0 0.0
        %559 = vmatpush1.msra.mxu0 0.0
        %560 = vmatprep.subr.mxu0 0.0
        %561 = vmatpush1.msra.mxu0 0.0
        %562 = vmatprep.mubr.f32.mxu0 0.0
        %563 = vmatmul.mubr.f32.gmra.mrb[0].mxu0 %v493
        %v564 = vpop.f32.mrb[0].mxu0
        %v565 = vadd.f32 0.0, %v564
        %v566 = vpop.f32.mrb[0].mxu0
        %v567 = vadd.f32 0.0, %v566
        %568 = vmatprep.mubr.f32.mxu0 0.0
        %569 = vmatmul.mubr.f32.gmra.mrb[0].mxu0 %v496
        %v570 = vpop.f32.mrb[0].mxu0
        %v571 = vadd.f32 0.0, %v570
        %v572 = vpop.f32.mrb[0].mxu0
        %v573 = vadd.f32 0.0, %v572
        %574 = vdwg.mxu0
        %v575 = vadd.f32 %v467, %v565
        %v576 = vadd.f32 %v469, %v567
        %v577 = vadd.f32 %v473, %v571
        %v578 = vadd.f32 %v475, %v573
        %v579 = vld [vmem:[%s2] sm:$0x3]
        %v581 = vlaneseq
        %v582 = vshrl.u32 %v581, 7
        %v583 = vsub.s32 0, %v582
        %v584 = vrot.slane %v579, %v583
        %v585 = vlaneseq
        %v586 = vshrl.u32 %v585, 7
        %v587 = vsub.s32 1, %v586
        %v588 = vrot.slane %v579, %v587
        %v591 = vadd.f32 %v575, %v584
        %v592 = vadd.f32 %v576, %v588
        %v593 = vadd.f32 %v577, %v584
        %v594 = vadd.f32 %v578, %v588
        %v595 = vmax.f32 %v591, 0.0
        %v596 = vmax.f32 %v592, 0.0
        %v597 = vmax.f32 %v593, 0.0
        %v598 = vmax.f32 %v594, 0.0
        %v603 = vcombine.low %v595, %v596
        %v604 = vcombine.high %v595, %v596
        %v605 = vcombine.low %v597, %v598
        %v606 = vcombine.high %v597, %v598
        %v612 = vunpack.c.l.s4 1966171168
        %v613 = vunpack.c.0.s8 %v612
        %v614 = vlaneseq
        %v615 = vshrl.u32 %v614, 7
        %v616 = vsub.s32 %v613, %v615
        %v617 = vrot.slane %v603, %v616
        %v619 = vunpack.c.l.s4 1966171168
        %v620 = vunpack.c.0.s8 %v619
        %v621 = vlaneseq
        %v622 = vshrl.u32 %v621, 7
        %v623 = vsub.s32 %v620, %v622
        %v624 = vrot.slane %v604, %v623
        %v626 = vunpack.c.l.s4 1966171168
        %v627 = vunpack.c.0.s8 %v626
        %v628 = vlaneseq
        %v629 = vshrl.u32 %v628, 7
        %v630 = vsub.s32 %v627, %v629
        %v631 = vrot.slane %v605, %v630
        %v633 = vunpack.c.l.s4 1966171168
        %v634 = vunpack.c.0.s8 %v633
        %v635 = vlaneseq
        %v636 = vshrl.u32 %v635, 7
        %v637 = vsub.s32 %v634, %v636
        %v638 = vrot.slane %v606, %v637
        %v643 = vrot.slane %v617, 4
        %v644 = vrot.slane %v624, 4
        %v645 = vrot.slane %v631, 4
        %v646 = vrot.slane %v638, 4
        %v651 = vmax.f32 %v617, %v643
        %v652 = vmax.f32 %v624, %v644
        %v653 = vmax.f32 %v631, %v645
        %v654 = vmax.f32 %v638, %v646
        %v659 = vrot.slane %v651, 2
        %v660 = vrot.slane %v652, 2
        %v661 = vrot.slane %v653, 2
        %v662 = vrot.slane %v654, 2
        %667 = vrot.lane.b32.xlu0 %v651, 96
        %v668 = vpop.permute.xlu0 %667
        %669 = vrot.lane.b32.xlu0 %v652, 96
        %v670 = vpop.permute.xlu0 %669
        %671 = vrot.lane.b32.xlu0 %v653, 96
        %v672 = vpop.permute.xlu0 %671
        %673 = vrot.lane.b32.xlu0 %v654, 96
        %v674 = vpop.permute.xlu0 %673
        %v675 = vrot.slane %v668, 2
        %v676 = vrot.slane %v670, 2
        %v677 = vrot.slane %v672, 2
        %v678 = vrot.slane %v674, 2
        %683 = vrot.lane.b32.xlu0 %v651, 64
        %v684 = vpop.permute.xlu0 %683
        %685 = vrot.lane.b32.xlu0 %v652, 64
        %v686 = vpop.permute.xlu0 %685
        %687 = vrot.lane.b32.xlu0 %v653, 64
        %v688 = vpop.permute.xlu0 %687
        %689 = vrot.lane.b32.xlu0 %v654, 64
        %v690 = vpop.permute.xlu0 %689
        %v691 = vrot.slane %v684, 2
        %v692 = vrot.slane %v686, 2
        %v693 = vrot.slane %v688, 2
        %v694 = vrot.slane %v690, 2
        %699 = vrot.lane.b32.xlu0 %v651, 32
        %v700 = vpop.permute.xlu0 %699
        %701 = vrot.lane.b32.xlu0 %v652, 32
        %v702 = vpop.permute.xlu0 %701
        %703 = vrot.lane.b32.xlu0 %v653, 32
        %v704 = vpop.permute.xlu0 %703
        %705 = vrot.lane.b32.xlu0 %v654, 32
        %v706 = vpop.permute.xlu0 %705
        %v707 = vrot.slane %v700, 2
        %v708 = vrot.slane %v702, 2
        %v709 = vrot.slane %v704, 2
        %v710 = vrot.slane %v706, 2
        %v727 = vcombine.low %v651, %v668
        %v729 = vunpack.c.l.s4 1934713408
        %v730 = vunpack.c.0.s8 %v729
        %v731 = vlaneseq
        %v732 = vshrl.u32 %v731, 7
        %v733 = vsub.s32 %v730, %v732
        %v734 = vrot.slane %v727, %v733
        %v735 = vcombine.high %v734, 0.0
        %v736 = vcombine.low %v684, %v700
        %v738 = vunpack.c.l.s4 1934713408
        %v739 = vunpack.c.0.s8 %v738
        %v740 = vlaneseq
        %v741 = vshrl.u32 %v740, 7
        %v742 = vsub.s32 %v739, %v741
        %v743 = vrot.slane %v736, %v742
        %v744 = vcombine.high %v743, 0.0
        %v745 = vcombine.low %v659, %v675
        %v747 = vunpack.c.l.s4 1934713408
        %v748 = vunpack.c.0.s8 %v747
        %v749 = vlaneseq
        %v750 = vshrl.u32 %v749, 7
        %v751 = vsub.s32 %v748, %v750
        %v752 = vrot.slane %v745, %v751
        %v753 = vcombine.high %v752, 0.0
        %v754 = vcombine.low %v691, %v707
        %v756 = vunpack.c.l.s4 1934713408
        %v757 = vunpack.c.0.s8 %v756
        %v758 = vlaneseq
        %v759 = vshrl.u32 %v758, 7
        %v760 = vsub.s32 %v757, %v759
        %v761 = vrot.slane %v754, %v760
        %v762 = vcombine.high %v761, 0.0
        %v763 = vcombine.low %v652, %v670
        %v765 = vunpack.c.l.s4 1934713408
        %v766 = vunpack.c.0.s8 %v765
        %v767 = vlaneseq
        %v768 = vshrl.u32 %v767, 7
        %v769 = vsub.s32 %v766, %v768
        %v770 = vrot.slane %v763, %v769
        %v771 = vcombine.high %v770, 0.0
        %v772 = vcombine.low %v686, %v702
        %v774 = vunpack.c.l.s4 1934713408
        %v775 = vunpack.c.0.s8 %v774
        %v776 = vlaneseq
        %v777 = vshrl.u32 %v776, 7
        %v778 = vsub.s32 %v775, %v777
        %v779 = vrot.slane %v772, %v778
        %v780 = vcombine.high %v779, 0.0
        %v781 = vcombine.low %v660, %v676
        %v783 = vunpack.c.l.s4 1934713408
        %v784 = vunpack.c.0.s8 %v783
        %v785 = vlaneseq
        %v786 = vshrl.u32 %v785, 7
        %v787 = vsub.s32 %v784, %v786
        %v788 = vrot.slane %v781, %v787
        %v789 = vcombine.high %v788, 0.0
        %v790 = vcombine.low %v692, %v708
        %v792 = vunpack.c.l.s4 1934713408
        %v793 = vunpack.c.0.s8 %v792
        %v794 = vlaneseq
        %v795 = vshrl.u32 %v794, 7
        %v796 = vsub.s32 %v793, %v795
        %v797 = vrot.slane %v790, %v796
        %v798 = vcombine.high %v797, 0.0
        %v799 = vcombine.low %v653, %v672
        %v801 = vunpack.c.l.s4 1934713408
        %v802 = vunpack.c.0.s8 %v801
        %v803 = vlaneseq
        %v804 = vshrl.u32 %v803, 7
        %v805 = vsub.s32 %v802, %v804
        %v806 = vrot.slane %v799, %v805
        %v807 = vcombine.high %v806, 0.0
        %v808 = vcombine.low %v688, %v704
        %v810 = vunpack.c.l.s4 1934713408
        %v811 = vunpack.c.0.s8 %v810
        %v812 = vlaneseq
        %v813 = vshrl.u32 %v812, 7
        %v814 = vsub.s32 %v811, %v813
        %v815 = vrot.slane %v808, %v814
        %v816 = vcombine.high %v815, 0.0
        %v817 = vcombine.low %v661, %v677
        %v819 = vunpack.c.l.s4 1934713408
        %v820 = vunpack.c.0.s8 %v819
        %v821 = vlaneseq
        %v822 = vshrl.u32 %v821, 7
        %v823 = vsub.s32 %v820, %v822
        %v824 = vrot.slane %v817, %v823
        %v825 = vcombine.high %v824, 0.0
        %v826 = vcombine.low %v693, %v709
        %v828 = vunpack.c.l.s4 1934713408
        %v829 = vunpack.c.0.s8 %v828
        %v830 = vlaneseq
        %v831 = vshrl.u32 %v830, 7
        %v832 = vsub.s32 %v829, %v831
        %v833 = vrot.slane %v826, %v832
        %v834 = vcombine.high %v833, 0.0
        %v835 = vcombine.low %v654, %v674
        %v837 = vunpack.c.l.s4 1934713408
        %v838 = vunpack.c.0.s8 %v837
        %v839 = vlaneseq
        %v840 = vshrl.u32 %v839, 7
        %v841 = vsub.s32 %v838, %v840
        %v842 = vrot.slane %v835, %v841
        %v843 = vcombine.high %v842, 0.0
        %v844 = vcombine.low %v690, %v706
        %v846 = vunpack.c.l.s4 1934713408
        %v847 = vunpack.c.0.s8 %v846
        %v848 = vlaneseq
        %v849 = vshrl.u32 %v848, 7
        %v850 = vsub.s32 %v847, %v849
        %v851 = vrot.slane %v844, %v850
        %v852 = vcombine.high %v851, 0.0
        %v853 = vcombine.low %v662, %v678
        %v855 = vunpack.c.l.s4 1934713408
        %v856 = vunpack.c.0.s8 %v855
        %v857 = vlaneseq
        %v858 = vshrl.u32 %v857, 7
        %v859 = vsub.s32 %v856, %v858
        %v860 = vrot.slane %v853, %v859
        %v861 = vcombine.high %v860, 0.0
        %v862 = vcombine.low %v694, %v710
        %v864 = vunpack.c.l.s4 1934713408
        %v865 = vunpack.c.0.s8 %v864
        %v866 = vlaneseq
        %v867 = vshrl.u32 %v866, 7
        %v868 = vsub.s32 %v865, %v867
        %v869 = vrot.slane %v862, %v868
        %v870 = vcombine.high %v869, 0.0
        %903 = vrot.lane.b32.xlu0 %v734, 112
        %v904 = vpop.permute.xlu0 %903
        %905 = vrot.lane.b32.xlu0 %v743, 112
        %v906 = vpop.permute.xlu0 %905
        %907 = vrot.lane.b32.xlu0 %v752, 112
        %v908 = vpop.permute.xlu0 %907
        %909 = vrot.lane.b32.xlu0 %v761, 112
        %v910 = vpop.permute.xlu0 %909
        %911 = vrot.lane.b32.xlu0 %v735, 112
        %v912 = vpop.permute.xlu0 %911
        %913 = vrot.lane.b32.xlu0 %v744, 112
        %v914 = vpop.permute.xlu0 %913
        %915 = vrot.lane.b32.xlu0 %v753, 112
        %v916 = vpop.permute.xlu0 %915
        %917 = vrot.lane.b32.xlu0 %v762, 112
        %v918 = vpop.permute.xlu0 %917
        %919 = vrot.lane.b32.xlu0 %v770, 112
        %v920 = vpop.permute.xlu0 %919
        %921 = vrot.lane.b32.xlu0 %v779, 112
        %v922 = vpop.permute.xlu0 %921
        %923 = vrot.lane.b32.xlu0 %v788, 112
        %v924 = vpop.permute.xlu0 %923
        %925 = vrot.lane.b32.xlu0 %v797, 112
        %v926 = vpop.permute.xlu0 %925
        %927 = vrot.lane.b32.xlu0 %v771, 112
        %v928 = vpop.permute.xlu0 %927
        %929 = vrot.lane.b32.xlu0 %v780, 112
        %v930 = vpop.permute.xlu0 %929
        %931 = vrot.lane.b32.xlu0 %v789, 112
        %v932 = vpop.permute.xlu0 %931
        %933 = vrot.lane.b32.xlu0 %v798, 112
        %v934 = vpop.permute.xlu0 %933
        %935 = vrot.lane.b32.xlu0 %v806, 112
        %v936 = vpop.permute.xlu0 %935
        %937 = vrot.lane.b32.xlu0 %v815, 112
        %v938 = vpop.permute.xlu0 %937
        %939 = vrot.lane.b32.xlu0 %v824, 112
        %v940 = vpop.permute.xlu0 %939
        %941 = vrot.lane.b32.xlu0 %v833, 112
        %v942 = vpop.permute.xlu0 %941
        %943 = vrot.lane.b32.xlu0 %v807, 112
        %v944 = vpop.permute.xlu0 %943
        %945 = vrot.lane.b32.xlu0 %v816, 112
        %v946 = vpop.permute.xlu0 %945
        %947 = vrot.lane.b32.xlu0 %v825, 112
        %v948 = vpop.permute.xlu0 %947
        %949 = vrot.lane.b32.xlu0 %v834, 112
        %v950 = vpop.permute.xlu0 %949
        %951 = vrot.lane.b32.xlu0 %v842, 112
        %v952 = vpop.permute.xlu0 %951
        %953 = vrot.lane.b32.xlu0 %v851, 112
        %v954 = vpop.permute.xlu0 %953
        %955 = vrot.lane.b32.xlu0 %v860, 112
        %v956 = vpop.permute.xlu0 %955
        %957 = vrot.lane.b32.xlu0 %v869, 112
        %v958 = vpop.permute.xlu0 %957
        %959 = vrot.lane.b32.xlu0 %v843, 112
        %v960 = vpop.permute.xlu0 %959
        %961 = vrot.lane.b32.xlu0 %v852, 112
        %v962 = vpop.permute.xlu0 %961
        %963 = vrot.lane.b32.xlu0 %v861, 112
        %v964 = vpop.permute.xlu0 %963
        %965 = vrot.lane.b32.xlu0 %v870, 112
        %v966 = vpop.permute.xlu0 %965
        %v999 = vmax.f32 %v734, %v904
        %v1000 = vmax.f32 %v743, %v906
        %v1001 = vmax.f32 %v752, %v908
        %v1002 = vmax.f32 %v761, %v910
        %v1003 = vmax.f32 %v735, %v912
        %v1004 = vmax.f32 %v744, %v914
        %v1005 = vmax.f32 %v753, %v916
        %v1006 = vmax.f32 %v762, %v918
        %v1007 = vmax.f32 %v770, %v920
        %v1008 = vmax.f32 %v779, %v922
        %v1009 = vmax.f32 %v788, %v924
        %v1010 = vmax.f32 %v797, %v926
        %v1011 = vmax.f32 %v771, %v928
        %v1012 = vmax.f32 %v780, %v930
        %v1013 = vmax.f32 %v789, %v932
        %v1014 = vmax.f32 %v798, %v934
        %v1015 = vmax.f32 %v806, %v936
        %v1016 = vmax.f32 %v815, %v938
        %v1017 = vmax.f32 %v824, %v940
        %v1018 = vmax.f32 %v833, %v942
        %v1019 = vmax.f32 %v807, %v944
        %v1020 = vmax.f32 %v816, %v946
        %v1021 = vmax.f32 %v825, %v948
        %v1022 = vmax.f32 %v834, %v950
        %v1023 = vmax.f32 %v842, %v952
        %v1024 = vmax.f32 %v851, %v954
        %v1025 = vmax.f32 %v860, %v956
        %v1026 = vmax.f32 %v869, %v958
        %v1027 = vmax.f32 %v843, %v960
        %v1028 = vmax.f32 %v852, %v962
        %v1029 = vmax.f32 %v861, %v964
        %v1030 = vmax.f32 %v870, %v966
        %v1031 = vcombine.low %v999, %v1003
        %v1033 = vunpack.c.l.s4 1934713408
        %v1034 = vunpack.c.0.s8 %v1033
        %v1035 = vlaneseq
        %v1036 = vshrl.u32 %v1035, 7
        %v1037 = vsub.s32 %v1034, %v1036
        %v1038 = vrot.slane %v1031, %v1037
        %v1039 = vcombine.high %v1038, 0.0
        %v1040 = vcombine.low %v1007, %v1011
        %v1042 = vunpack.c.l.s4 1934713408
        %v1043 = vunpack.c.0.s8 %v1042
        %v1044 = vlaneseq
        %v1045 = vshrl.u32 %v1044, 7
        %v1046 = vsub.s32 %v1043, %v1045
        %v1047 = vrot.slane %v1040, %v1046
        %v1048 = vcombine.high %v1047, 0.0
        %v1049 = vcombine.low %v1015, %v1019
        %v1051 = vunpack.c.l.s4 1934713408
        %v1052 = vunpack.c.0.s8 %v1051
        %v1053 = vlaneseq
        %v1054 = vshrl.u32 %v1053, 7
        %v1055 = vsub.s32 %v1052, %v1054
        %v1056 = vrot.slane %v1049, %v1055
        %v1057 = vcombine.high %v1056, 0.0
        %v1058 = vcombine.low %v1023, %v1027
        %v1060 = vunpack.c.l.s4 1934713408
        %v1061 = vunpack.c.0.s8 %v1060
        %v1062 = vlaneseq
        %v1063 = vshrl.u32 %v1062, 7
        %v1064 = vsub.s32 %v1061, %v1063
        %v1065 = vrot.slane %v1058, %v1064
        %v1066 = vcombine.high %v1065, 0.0
        %v1067 = vcombine.low %v1000, %v1004
        %v1069 = vunpack.c.l.s4 1934713408
        %v1070 = vunpack.c.0.s8 %v1069
        %v1071 = vlaneseq
        %v1072 = vshrl.u32 %v1071, 7
        %v1073 = vsub.s32 %v1070, %v1072
        %v1074 = vrot.slane %v1067, %v1073
        %v1075 = vcombine.high %v1074, 0.0
        %v1076 = vcombine.low %v1008, %v1012
        %v1078 = vunpack.c.l.s4 1934713408
        %v1079 = vunpack.c.0.s8 %v1078
        %v1080 = vlaneseq
        %v1081 = vshrl.u32 %v1080, 7
        %v1082 = vsub.s32 %v1079, %v1081
        %v1083 = vrot.slane %v1076, %v1082
        %v1084 = vcombine.high %v1083, 0.0
        %v1085 = vcombine.low %v1016, %v1020
        %v1087 = vunpack.c.l.s4 1934713408
        %v1088 = vunpack.c.0.s8 %v1087
        %v1089 = vlaneseq
        %v1090 = vshrl.u32 %v1089, 7
        %v1091 = vsub.s32 %v1088, %v1090
        %v1092 = vrot.slane %v1085, %v1091
        %v1093 = vcombine.high %v1092, 0.0
        %v1094 = vcombine.low %v1024, %v1028
        %v1096 = vunpack.c.l.s4 1934713408
        %v1097 = vunpack.c.0.s8 %v1096
        %v1098 = vlaneseq
        %v1099 = vshrl.u32 %v1098, 7
        %v1100 = vsub.s32 %v1097, %v1099
        %v1101 = vrot.slane %v1094, %v1100
        %v1102 = vcombine.high %v1101, 0.0
        %v1103 = vcombine.low %v1001, %v1005
        %v1105 = vunpack.c.l.s4 1934713408
        %v1106 = vunpack.c.0.s8 %v1105
        %v1107 = vlaneseq
        %v1108 = vshrl.u32 %v1107, 7
        %v1109 = vsub.s32 %v1106, %v1108
        %v1110 = vrot.slane %v1103, %v1109
        %v1111 = vcombine.high %v1110, 0.0
        %v1112 = vcombine.low %v1009, %v1013
        %v1114 = vunpack.c.l.s4 1934713408
        %v1115 = vunpack.c.0.s8 %v1114
        %v1116 = vlaneseq
        %v1117 = vshrl.u32 %v1116, 7
        %v1118 = vsub.s32 %v1115, %v1117
        %v1119 = vrot.slane %v1112, %v1118
        %v1120 = vcombine.high %v1119, 0.0
        %v1121 = vcombine.low %v1017, %v1021
        %v1123 = vunpack.c.l.s4 1934713408
        %v1124 = vunpack.c.0.s8 %v1123
        %v1125 = vlaneseq
        %v1126 = vshrl.u32 %v1125, 7
        %v1127 = vsub.s32 %v1124, %v1126
        %v1128 = vrot.slane %v1121, %v1127
        %v1129 = vcombine.high %v1128, 0.0
        %v1130 = vcombine.low %v1025, %v1029
        %v1132 = vunpack.c.l.s4 1934713408
        %v1133 = vunpack.c.0.s8 %v1132
        %v1134 = vlaneseq
        %v1135 = vshrl.u32 %v1134, 7
        %v1136 = vsub.s32 %v1133, %v1135
        %v1137 = vrot.slane %v1130, %v1136
        %v1138 = vcombine.high %v1137, 0.0
        %v1139 = vcombine.low %v1002, %v1006
        %v1141 = vunpack.c.l.s4 1934713408
        %v1142 = vunpack.c.0.s8 %v1141
        %v1143 = vlaneseq
        %v1144 = vshrl.u32 %v1143, 7
        %v1145 = vsub.s32 %v1142, %v1144
        %v1146 = vrot.slane %v1139, %v1145
        %v1147 = vcombine.high %v1146, 0.0
        %v1148 = vcombine.low %v1010, %v1014
        %v1150 = vunpack.c.l.s4 1934713408
        %v1151 = vunpack.c.0.s8 %v1150
        %v1152 = vlaneseq
        %v1153 = vshrl.u32 %v1152, 7
        %v1154 = vsub.s32 %v1151, %v1153
        %v1155 = vrot.slane %v1148, %v1154
        %v1156 = vcombine.high %v1155, 0.0
        %v1157 = vcombine.low %v1018, %v1022
        %v1159 = vunpack.c.l.s4 1934713408
        %v1160 = vunpack.c.0.s8 %v1159
        %v1161 = vlaneseq
        %v1162 = vshrl.u32 %v1161, 7
        %v1163 = vsub.s32 %v1160, %v1162
        %v1164 = vrot.slane %v1157, %v1163
        %v1165 = vcombine.high %v1164, 0.0
        %v1166 = vcombine.low %v1026, %v1030
        %v1168 = vunpack.c.l.s4 1934713408
        %v1169 = vunpack.c.0.s8 %v1168
        %v1170 = vlaneseq
        %v1171 = vshrl.u32 %v1170, 7
        %v1172 = vsub.s32 %v1169, %v1171
        %v1173 = vrot.slane %v1166, %v1172
        %v1174 = vcombine.high %v1173, 0.0
        %v1179 = vcombine.low %v1038, %v1047
        %v1180 = vcombine.low %v1056, %v1065
        %v1182 = vunpack.c.l.s4 1983009808
        %v1183 = vunpack.c.0.s8 %v1182
        %v1184 = vlaneseq
        %v1185 = vshrl.u32 %v1184, 7
        %v1186 = vsub.s32 %v1183, %v1185
        %v1187 = vrot.slane %v1179, %v1186
        %v1189 = vunpack.c.l.s4 1983009808
        %v1190 = vunpack.c.0.s8 %v1189
        %v1191 = vlaneseq
        %v1192 = vshrl.u32 %v1191, 7
        %v1193 = vsub.s32 %v1190, %v1192
        %v1194 = vrot.slane %v1180, %v1193
        %v1195 = vcombine.low %v1187, %v1194
        %v1201 = vcombine.low %v1039, %v1048
        %v1202 = vcombine.low %v1057, %v1066
        %v1204 = vunpack.c.l.s4 1983009808
        %v1205 = vunpack.c.0.s8 %v1204
        %v1206 = vlaneseq
        %v1207 = vshrl.u32 %v1206, 7
        %v1208 = vsub.s32 %v1205, %v1207
        %v1209 = vrot.slane %v1201, %v1208
        %v1211 = vunpack.c.l.s4 1983009808
        %v1212 = vunpack.c.0.s8 %v1211
        %v1213 = vlaneseq
        %v1214 = vshrl.u32 %v1213, 7
        %v1215 = vsub.s32 %v1212, %v1214
        %v1216 = vrot.slane %v1202, %v1215
        %v1217 = vcombine.low %v1209, %v1216
        %1218 = vrot.lane.b32.xlu0 %v1217, 16
        %v1219 = vpop.permute.xlu0 %1218
        %v1225 = vcombine.low %v1074, %v1083
        %v1226 = vcombine.low %v1092, %v1101
        %v1228 = vunpack.c.l.s4 1983009808
        %v1229 = vunpack.c.0.s8 %v1228
        %v1230 = vlaneseq
        %v1231 = vshrl.u32 %v1230, 7
        %v1232 = vsub.s32 %v1229, %v1231
        %v1233 = vrot.slane %v1225, %v1232
        %v1235 = vunpack.c.l.s4 1983009808
        %v1236 = vunpack.c.0.s8 %v1235
        %v1237 = vlaneseq
        %v1238 = vshrl.u32 %v1237, 7
        %v1239 = vsub.s32 %v1236, %v1238
        %v1240 = vrot.slane %v1226, %v1239
        %v1241 = vcombine.low %v1233, %v1240
        %1242 = vrot.lane.b32.xlu0 %v1241, 32
        %v1243 = vpop.permute.xlu0 %1242
        %v1249 = vcombine.low %v1075, %v1084
        %v1250 = vcombine.low %v1093, %v1102
        %v1252 = vunpack.c.l.s4 1983009808
        %v1253 = vunpack.c.0.s8 %v1252
        %v1254 = vlaneseq
        %v1255 = vshrl.u32 %v1254, 7
        %v1256 = vsub.s32 %v1253, %v1255
        %v1257 = vrot.slane %v1249, %v1256
        %v1259 = vunpack.c.l.s4 1983009808
        %v1260 = vunpack.c.0.s8 %v1259
        %v1261 = vlaneseq
        %v1262 = vshrl.u32 %v1261, 7
        %v1263 = vsub.s32 %v1260, %v1262
        %v1264 = vrot.slane %v1250, %v1263
        %v1265 = vcombine.low %v1257, %v1264
        %1266 = vrot.lane.b32.xlu0 %v1265, 48
        %v1267 = vpop.permute.xlu0 %1266
        %v1273 = vcombine.low %v1110, %v1119
        %v1274 = vcombine.low %v1128, %v1137
        %v1276 = vunpack.c.l.s4 1983009808
        %v1277 = vunpack.c.0.s8 %v1276
        %v1278 = vlaneseq
        %v1279 = vshrl.u32 %v1278, 7
        %v1280 = vsub.s32 %v1277, %v1279
        %v1281 = vrot.slane %v1273, %v1280
        %v1283 = vunpack.c.l.s4 1983009808
        %v1284 = vunpack.c.0.s8 %v1283
        %v1285 = vlaneseq
        %v1286 = vshrl.u32 %v1285, 7
        %v1287 = vsub.s32 %v1284, %v1286
        %v1288 = vrot.slane %v1274, %v1287
        %v1289 = vcombine.low %v1281, %v1288
        %1290 = vrot.lane.b32.xlu0 %v1289, 64
        %v1291 = vpop.permute.xlu0 %1290
        %v1297 = vcombine.low %v1111, %v1120
        %v1298 = vcombine.low %v1129, %v1138
        %v1300 = vunpack.c.l.s4 1983009808
        %v1301 = vunpack.c.0.s8 %v1300
        %v1302 = vlaneseq
        %v1303 = vshrl.u32 %v1302, 7
        %v1304 = vsub.s32 %v1301, %v1303
        %v1305 = vrot.slane %v1297, %v1304
        %v1307 = vunpack.c.l.s4 1983009808
        %v1308 = vunpack.c.0.s8 %v1307
        %v1309 = vlaneseq
        %v1310 = vshrl.u32 %v1309, 7
        %v1311 = vsub.s32 %v1308, %v1310
        %v1312 = vrot.slane %v1298, %v1311
        %v1313 = vcombine.low %v1305, %v1312
        %1314 = vrot.lane.b32.xlu0 %v1313, 80
        %v1315 = vpop.permute.xlu0 %1314
        %v1321 = vcombine.low %v1146, %v1155
        %v1322 = vcombine.low %v1164, %v1173
        %v1324 = vunpack.c.l.s4 1983009808
        %v1325 = vunpack.c.0.s8 %v1324
        %v1326 = vlaneseq
        %v1327 = vshrl.u32 %v1326, 7
        %v1328 = vsub.s32 %v1325, %v1327
        %v1329 = vrot.slane %v1321, %v1328
        %v1331 = vunpack.c.l.s4 1983009808
        %v1332 = vunpack.c.0.s8 %v1331
        %v1333 = vlaneseq
        %v1334 = vshrl.u32 %v1333, 7
        %v1335 = vsub.s32 %v1332, %v1334
        %v1336 = vrot.slane %v1322, %v1335
        %v1337 = vcombine.low %v1329, %v1336
        %1338 = vrot.lane.b32.xlu0 %v1337, 96
        %v1339 = vpop.permute.xlu0 %1338
        %v1345 = vcombine.low %v1147, %v1156
        %v1346 = vcombine.low %v1165, %v1174
        %v1348 = vunpack.c.l.s4 1983009808
        %v1349 = vunpack.c.0.s8 %v1348
        %v1350 = vlaneseq
        %v1351 = vshrl.u32 %v1350, 7
        %v1352 = vsub.s32 %v1349, %v1351
        %v1353 = vrot.slane %v1345, %v1352
        %v1355 = vunpack.c.l.s4 1983009808
        %v1356 = vunpack.c.0.s8 %v1355
        %v1357 = vlaneseq
        %v1358 = vshrl.u32 %v1357, 7
        %v1359 = vsub.s32 %v1356, %v1358
        %v1360 = vrot.slane %v1346, %v1359
        %v1361 = vcombine.low %v1353, %v1360
        %1362 = vrot.lane.b32.xlu0 %v1361, 112
        %v1363 = vpop.permute.xlu0 %1362
        %vm1365 = vcmask 130048
        %v1366 = vsel %vm1365, %v1195, %v1219
        %vm1367 = vcmask 261120
        %v1368 = vsel %vm1367, %v1366, %v1243
        %v1369 = vsel %vm279, %v1368, %v1267
        %vm1370 = vcmask 523264
        %v1371 = vsel %vm1370, %v1369, %v1291
        %vm1372 = vcmask 654336
        %v1373 = vsel %vm1372, %v1371, %v1315
        %vm1374 = vcmask 785408
        %v1375 = vsel %vm1374, %v1373, %v1339
        %vm1376 = vcmask 916480
        %v1377 = vsel %vm1376, %v1375, %v1363
        %1378 = vst [vmem:[#allocation3 + $0x1] sm:$0xff] %v1377
        %v1379 = vld [vmem:[#allocation3] sm:$0xff]
        %v1380 = vld [vmem:[#allocation9] sm:$0xff]
        %v1381 = vld [vmem:[#allocation9 + $0x8] sm:$0xff]
        %v1382 = vld [vmem:[#allocation9 + $0x10] sm:$0xff]
        %v1383 = vld [vmem:[#allocation9 + $0x18] sm:$0xff]
        %v1384 = vld [vmem:[#allocation9 + $0x20] sm:$0xff]
        %v1385 = vld [vmem:[#allocation9 + $0x28] sm:$0xff]
        %v1386 = vld [vmem:[#allocation9 + $0x30] sm:$0xff]
        %v1387 = vld [vmem:[#allocation9 + $0x38] sm:$0xff]
        %v1388 = vld [vmem:[#allocation9 + $0x40] sm:$0xff]
        %v1389 = vld [vmem:[#allocation9 + $0x48] sm:$0xff]
        %v1390 = vld [vmem:[#allocation9 + $0x50] sm:$0xff]
        %v1391 = vld [vmem:[#allocation9 + $0x58] sm:$0xff]
        %v1392 = vld [vmem:[#allocation9 + $0x60] sm:$0xff]
        %v1393 = vld [vmem:[#allocation9 + $0x68] sm:$0xff]
        %v1394 = vld [vmem:[#allocation9 + $0x70] sm:$0xff]
        %v1395 = vld [vmem:[#allocation9 + $0x78] sm:$0xff]
        %v1396 = vld [vmem:[#allocation9 + $0x80] sm:$0xff]
        %v1397 = vld [vmem:[#allocation9 + $0x88] sm:$0xff]
        %v1398 = vld [vmem:[#allocation9 + $0x90] sm:$0xff]
        %v1399 = vld [vmem:[#allocation9 + $0x98] sm:$0xff]
        %v1400 = vld [vmem:[#allocation9 + $0xa0] sm:$0xff]
        %v1401 = vld [vmem:[#allocation9 + $0xa8] sm:$0xff]
        %v1402 = vld [vmem:[#allocation9 + $0xb0] sm:$0xff]
        %v1403 = vld [vmem:[#allocation9 + $0xb8] sm:$0xff]
        %v1404 = vld [vmem:[#allocation9 + $0xc0] sm:$0xff]
        %v1405 = vld [vmem:[#allocation9 + $0xc8] sm:$0xff]
        %v1406 = vld [vmem:[#allocation9 + $0xd0] sm:$0xff]
        %v1407 = vld [vmem:[#allocation9 + $0xd8] sm:$0xff]
        %v1408 = vld [vmem:[#allocation9 + $0xe0] sm:$0xff]
        %v1409 = vld [vmem:[#allocation9 + $0xe8] sm:$0xff]
        %v1410 = vld [vmem:[#allocation9 + $0xf0] sm:$0xff]
        %v1411 = vld [vmem:[#allocation9 + $0xf8] sm:$0xff]
        %v1412 = vld [vmem:[#allocation3 + $0x1] sm:$0xff]
        %s1413 = scalar_lea.vmem [#allocation9], 256
        %v1414 = vld [vmem:[%s1413] sm:$0xff]
        %v1415 = vld [vmem:[%s1413 + $0x8] sm:$0xff]
        %v1416 = vld [vmem:[%s1413 + $0x10] sm:$0xff]
        %v1417 = vld [vmem:[%s1413 + $0x18] sm:$0xff]
        %v1418 = vld [vmem:[%s1413 + $0x20] sm:$0xff]
        %v1419 = vld [vmem:[%s1413 + $0x28] sm:$0xff]
        %v1420 = vld [vmem:[%s1413 + $0x30] sm:$0xff]
        %v1421 = vld [vmem:[%s1413 + $0x38] sm:$0xff]
        %v1422 = vld [vmem:[%s1413 + $0x40] sm:$0xff]
        %v1423 = vld [vmem:[%s1413 + $0x48] sm:$0xff]
        %v1424 = vld [vmem:[%s1413 + $0x50] sm:$0xff]
        %v1425 = vld [vmem:[%s1413 + $0x58] sm:$0xff]
        %v1426 = vld [vmem:[%s1413 + $0x60] sm:$0xff]
        %v1427 = vld [vmem:[%s1413 + $0x68] sm:$0xff]
        %v1428 = vld [vmem:[%s1413 + $0x70] sm:$0xff]
        %v1429 = vld [vmem:[%s1413 + $0x78] sm:$0xff]
        %v1430 = vld [vmem:[%s1413 + $0x80] sm:$0xff]
        %v1431 = vld [vmem:[%s1413 + $0x88] sm:$0xff]
        %v1432 = vld [vmem:[%s1413 + $0x90] sm:$0xff]
        %v1433 = vld [vmem:[%s1413 + $0x98] sm:$0xff]
        %v1434 = vld [vmem:[%s1413 + $0xa0] sm:$0xff]
        %v1435 = vld [vmem:[%s1413 + $0xa8] sm:$0xff]
        %v1436 = vld [vmem:[%s1413 + $0xb0] sm:$0xff]
        %v1437 = vld [vmem:[%s1413 + $0xb8] sm:$0xff]
        %v1438 = vld [vmem:[%s1413 + $0xc0] sm:$0xff]
        %v1439 = vld [vmem:[%s1413 + $0xc8] sm:$0xff]
        %v1440 = vld [vmem:[%s1413 + $0xd0] sm:$0xff]
        %v1441 = vld [vmem:[%s1413 + $0xd8] sm:$0xff]
        %v1442 = vld [vmem:[%s1413 + $0xe0] sm:$0xff]
        %v1443 = vld [vmem:[%s1413 + $0xe8] sm:$0xff]
        %v1444 = vld [vmem:[%s1413 + $0xf0] sm:$0xff]
        %v1445 = vld [vmem:[%s1413 + $0xf8] sm:$0xff]
        %1446 = vmatprep.subr.mxu0 %v1415
        %1447 = vmatpush1.msra.mxu0 %v1414
        %1448 = vmatprep.subr.mxu0 %v1417
        %1449 = vmatpush1.msra.mxu0 %v1416
        %1450 = vmatprep.subr.mxu0 %v1419
        %1451 = vmatpush1.msra.mxu0 %v1418
        %1452 = vmatprep.subr.mxu0 %v1421
        %1453 = vmatpush1.msra.mxu0 %v1420
        %1454 = vmatprep.subr.mxu0 %v1423
        %1455 = vmatpush1.msra.mxu0 %v1422
        %1456 = vmatprep.subr.mxu0 %v1425
        %1457 = vmatpush1.msra.mxu0 %v1424
        %1458 = vmatprep.subr.mxu0 %v1427
        %1459 = vmatpush1.msra.mxu0 %v1426
        %1460 = vmatprep.subr.mxu0 %v1429
        %1461 = vmatpush1.msra.mxu0 %v1428
        %1462 = vmatprep.subr.mxu0 %v1431
        %1463 = vmatpush1.msra.mxu0 %v1430
        %1464 = vmatprep.subr.mxu0 %v1433
        %1465 = vmatpush1.msra.mxu0 %v1432
        %1466 = vmatprep.subr.mxu0 %v1435
        %1467 = vmatpush1.msra.mxu0 %v1434
        %1468 = vmatprep.subr.mxu0 %v1437
        %1469 = vmatpush1.msra.mxu0 %v1436
        %1470 = vmatprep.subr.mxu0 %v1439
        %1471 = vmatpush1.msra.mxu0 %v1438
        %1472 = vmatprep.subr.mxu0 %v1441
        %1473 = vmatpush1.msra.mxu0 %v1440
        %1474 = vmatprep.subr.mxu0 %v1443
        %1475 = vmatpush1.msra.mxu0 %v1442
        %1476 = vmatprep.subr.mxu0 %v1445
        %1477 = vmatpush1.msra.mxu0 %v1444
        %1478 = vmatprep.subr.mxu0 0.0
        %1479 = vmatpush1.msra.mxu0 0.0
        %1480 = vmatprep.subr.mxu0 0.0
        %1481 = vmatpush1.msra.mxu0 0.0
        %1482 = vmatprep.subr.mxu0 0.0
        %1483 = vmatpush1.msra.mxu0 0.0
        %1484 = vmatprep.subr.mxu0 0.0
        %1485 = vmatpush1.msra.mxu0 0.0
        %1486 = vmatprep.subr.mxu0 0.0
        %1487 = vmatpush1.msra.mxu0 0.0
        %1488 = vmatprep.subr.mxu0 0.0
        %1489 = vmatpush1.msra.mxu0 0.0
        %1490 = vmatprep.subr.mxu0 0.0
        %1491 = vmatpush1.msra.mxu0 0.0
        %1492 = vmatprep.subr.mxu0 0.0
        %1493 = vmatpush1.msra.mxu0 0.0
        %1494 = vmatprep.subr.mxu0 0.0
        %1495 = vmatpush1.msra.mxu0 0.0
        %1496 = vmatprep.subr.mxu0 0.0
        %1497 = vmatpush1.msra.mxu0 0.0
        %1498 = vmatprep.subr.mxu0 0.0
        %1499 = vmatpush1.msra.mxu0 0.0
        %1500 = vmatprep.subr.mxu0 0.0
        %1501 = vmatpush1.msra.mxu0 0.0
        %1502 = vmatprep.subr.mxu0 0.0
        %1503 = vmatpush1.msra.mxu0 0.0
        %1504 = vmatprep.subr.mxu0 0.0
        %1505 = vmatpush1.msra.mxu0 0.0
        %1506 = vmatprep.subr.mxu0 0.0
        %1507 = vmatpush1.msra.mxu0 0.0
        %1508 = vmatprep.subr.mxu0 0.0
        %1509 = vmatpush1.msra.mxu0 0.0
        %1510 = vmatprep.mubr.f32.mxu0 0.0
        %1511 = vmatmul.mubr.f32.gmra.mrb[0].mxu0 %v1412
        %v1512 = vpop.f32.mrb[0].mxu0
        %v1513 = vadd.f32 0.0, %v1512
        %v1514 = vpop.f32.mrb[0].mxu0
        %v1515 = vadd.f32 0.0, %v1514
        %1516 = vdwg.mxu0
        %1517 = vmatprep.subr.mxu0 %v1381
        %1518 = vmatpush1.msra.mxu0 %v1380
        %1519 = vmatprep.subr.mxu0 %v1383
        %1520 = vmatpush1.msra.mxu0 %v1382
        %1521 = vmatprep.subr.mxu0 %v1385
        %1522 = vmatpush1.msra.mxu0 %v1384
        %1523 = vmatprep.subr.mxu0 %v1387
        %1524 = vmatpush1.msra.mxu0 %v1386
        %1525 = vmatprep.subr.mxu0 %v1389
        %1526 = vmatpush1.msra.mxu0 %v1388
        %1527 = vmatprep.subr.mxu0 %v1391
        %1528 = vmatpush1.msra.mxu0 %v1390
        %1529 = vmatprep.subr.mxu0 %v1393
        %1530 = vmatpush1.msra.mxu0 %v1392
        %1531 = vmatprep.subr.mxu0 %v1395
        %1532 = vmatpush1.msra.mxu0 %v1394
        %1533 = vmatprep.subr.mxu0 %v1397
        %1534 = vmatpush1.msra.mxu0 %v1396
        %1535 = vmatprep.subr.mxu0 %v1399
        %1536 = vmatpush1.msra.mxu0 %v1398
        %1537 = vmatprep.subr.mxu0 %v1401
        %1538 = vmatpush1.msra.mxu0 %v1400
        %1539 = vmatprep.subr.mxu0 %v1403
        %1540 = vmatpush1.msra.mxu0 %v1402
        %1541 = vmatprep.subr.mxu0 %v1405
        %1542 = vmatpush1.msra.mxu0 %v1404
        %1543 = vmatprep.subr.mxu0 %v1407
        %1544 = vmatpush1.msra.mxu0 %v1406
        %1545 = vmatprep.subr.mxu0 %v1409
        %1546 = vmatpush1.msra.mxu0 %v1408
        %1547 = vmatprep.subr.mxu0 %v1411
        %1548 = vmatpush1.msra.mxu0 %v1410
        %1549 = vmatprep.subr.mxu0 0.0
        %1550 = vmatpush1.msra.mxu0 0.0
        %1551 = vmatprep.subr.mxu0 0.0
        %1552 = vmatpush1.msra.mxu0 0.0
        %1553 = vmatprep.subr.mxu0 0.0
        %1554 = vmatpush1.msra.mxu0 0.0
        %1555 = vmatprep.subr.mxu0 0.0
        %1556 = vmatpush1.msra.mxu0 0.0
        %1557 = vmatprep.subr.mxu0 0.0
        %1558 = vmatpush1.msra.mxu0 0.0
        %1559 = vmatprep.subr.mxu0 0.0
        %1560 = vmatpush1.msra.mxu0 0.0
        %1561 = vmatprep.subr.mxu0 0.0
        %1562 = vmatpush1.msra.mxu0 0.0
        %1563 = vmatprep.subr.mxu0 0.0
        %1564 = vmatpush1.msra.mxu0 0.0
        %1565 = vmatprep.subr.mxu0 0.0
        %1566 = vmatpush1.msra.mxu0 0.0
        %1567 = vmatprep.subr.mxu0 0.0
        %1568 = vmatpush1.msra.mxu0 0.0
        %1569 = vmatprep.subr.mxu0 0.0
        %1570 = vmatpush1.msra.mxu0 0.0
        %1571 = vmatprep.subr.mxu0 0.0
        %1572 = vmatpush1.msra.mxu0 0.0
        %1573 = vmatprep.subr.mxu0 0.0
        %1574 = vmatpush1.msra.mxu0 0.0
        %1575 = vmatprep.subr.mxu0 0.0
        %1576 = vmatpush1.msra.mxu0 0.0
        %1577 = vmatprep.subr.mxu0 0.0
        %1578 = vmatpush1.msra.mxu0 0.0
        %1579 = vmatprep.subr.mxu0 0.0
        %1580 = vmatpush1.msra.mxu0 0.0
        %1581 = vmatprep.mubr.f32.mxu0 0.0
        %1582 = vmatmul.mubr.f32.gmra.mrb[0].mxu0 %v1379
        %v1583 = vpop.f32.mrb[0].mxu0
        %v1584 = vadd.f32 %v1513, %v1583
        %v1585 = vpop.f32.mrb[0].mxu0
        %v1586 = vadd.f32 %v1515, %v1585
        %1587 = vdwg.mxu0
        %v1588 = vld [vmem:[#allocation3 + $0x2] sm:$0xff]
        %s1589 = scalar_lea.vmem [#allocation9], 512
        %v1590 = vld [vmem:[%s1589] sm:$0xff]
        %v1591 = vld [vmem:[%s1589 + $0x8] sm:$0xff]
        %v1592 = vld [vmem:[%s1589 + $0x10] sm:$0xff]
        %v1593 = vld [vmem:[%s1589 + $0x18] sm:$0xff]
        %v1594 = vld [vmem:[%s1589 + $0x20] sm:$0xff]
        %v1595 = vld [vmem:[%s1589 + $0x28] sm:$0xff]
        %v1596 = vld [vmem:[%s1589 + $0x30] sm:$0xff]
        %v1597 = vld [vmem:[%s1589 + $0x38] sm:$0xff]
        %v1598 = vld [vmem:[%s1589 + $0x40] sm:$0xff]
        %v1599 = vld [vmem:[%s1589 + $0x48] sm:$0xff]
        %v1600 = vld [vmem:[%s1589 + $0x50] sm:$0xff]
        %v1601 = vld [vmem:[%s1589 + $0x58] sm:$0xff]
        %v1602 = vld [vmem:[%s1589 + $0x60] sm:$0xff]
        %v1603 = vld [vmem:[%s1589 + $0x68] sm:$0xff]
        %v1604 = vld [vmem:[%s1589 + $0x70] sm:$0xff]
        %v1605 = vld [vmem:[%s1589 + $0x78] sm:$0xff]
        %v1606 = vld [vmem:[%s1589 + $0x80] sm:$0xff]
        %v1607 = vld [vmem:[%s1589 + $0x88] sm:$0xff]
        %v1608 = vld [vmem:[%s1589 + $0x90] sm:$0xff]
        %v1609 = vld [vmem:[%s1589 + $0x98] sm:$0xff]
        %v1610 = vld [vmem:[%s1589 + $0xa0] sm:$0xff]
        %v1611 = vld [vmem:[%s1589 + $0xa8] sm:$0xff]
        %v1612 = vld [vmem:[%s1589 + $0xb0] sm:$0xff]
        %v1613 = vld [vmem:[%s1589 + $0xb8] sm:$0xff]
        %v1614 = vld [vmem:[%s1589 + $0xc0] sm:$0xff]
        %v1615 = vld [vmem:[%s1589 + $0xc8] sm:$0xff]
        %v1616 = vld [vmem:[%s1589 + $0xd0] sm:$0xff]
        %v1617 = vld [vmem:[%s1589 + $0xd8] sm:$0xff]
        %v1618 = vld [vmem:[%s1589 + $0xe0] sm:$0xff]
        %v1619 = vld [vmem:[%s1589 + $0xe8] sm:$0xff]
        %v1620 = vld [vmem:[%s1589 + $0xf0] sm:$0xff]
        %v1621 = vld [vmem:[%s1589 + $0xf8] sm:$0xff]
        %1622 = vmatprep.subr.mxu0 %v1591
        %1623 = vmatpush1.msra.mxu0 %v1590
        %1624 = vmatprep.subr.mxu0 %v1593
        %1625 = vmatpush1.msra.mxu0 %v1592
        %1626 = vmatprep.subr.mxu0 %v1595
        %1627 = vmatpush1.msra.mxu0 %v1594
        %1628 = vmatprep.subr.mxu0 %v1597
        %1629 = vmatpush1.msra.mxu0 %v1596
        %1630 = vmatprep.subr.mxu0 %v1599
        %1631 = vmatpush1.msra.mxu0 %v1598
        %1632 = vmatprep.subr.mxu0 %v1601
        %1633 = vmatpush1.msra.mxu0 %v1600
        %1634 = vmatprep.subr.mxu0 %v1603
        %1635 = vmatpush1.msra.mxu0 %v1602
        %1636 = vmatprep.subr.mxu0 %v1605
        %1637 = vmatpush1.msra.mxu0 %v1604
        %1638 = vmatprep.subr.mxu0 %v1607
        %1639 = vmatpush1.msra.mxu0 %v1606
        %1640 = vmatprep.subr.mxu0 %v1609
        %1641 = vmatpush1.msra.mxu0 %v1608
        %1642 = vmatprep.subr.mxu0 %v1611
        %1643 = vmatpush1.msra.mxu0 %v1610
        %1644 = vmatprep.subr.mxu0 %v1613
        %1645 = vmatpush1.msra.mxu0 %v1612
        %1646 = vmatprep.subr.mxu0 %v1615
        %1647 = vmatpush1.msra.mxu0 %v1614
        %1648 = vmatprep.subr.mxu0 %v1617
        %1649 = vmatpush1.msra.mxu0 %v1616
        %1650 = vmatprep.subr.mxu0 %v1619
        %1651 = vmatpush1.msra.mxu0 %v1618
        %1652 = vmatprep.subr.mxu0 %v1621
        %1653 = vmatpush1.msra.mxu0 %v1620
        %1654 = vmatprep.subr.mxu0 0.0
        %1655 = vmatpush1.msra.mxu0 0.0
        %1656 = vmatprep.subr.mxu0 0.0
        %1657 = vmatpush1.msra.mxu0 0.0
        %1658 = vmatprep.subr.mxu0 0.0
        %1659 = vmatpush1.msra.mxu0 0.0
        %1660 = vmatprep.subr.mxu0 0.0
        %1661 = vmatpush1.msra.mxu0 0.0
        %1662 = vmatprep.subr.mxu0 0.0
        %1663 = vmatpush1.msra.mxu0 0.0
        %1664 = vmatprep.subr.mxu0 0.0
        %1665 = vmatpush1.msra.mxu0 0.0
        %1666 = vmatprep.subr.mxu0 0.0
        %1667 = vmatpush1.msra.mxu0 0.0
        %1668 = vmatprep.subr.mxu0 0.0
        %1669 = vmatpush1.msra.mxu0 0.0
        %1670 = vmatprep.subr.mxu0 0.0
        %1671 = vmatpush1.msra.mxu0 0.0
        %1672 = vmatprep.subr.mxu0 0.0
        %1673 = vmatpush1.msra.mxu0 0.0
        %1674 = vmatprep.subr.mxu0 0.0
        %1675 = vmatpush1.msra.mxu0 0.0
        %1676 = vmatprep.subr.mxu0 0.0
        %1677 = vmatpush1.msra.mxu0 0.0
        %1678 = vmatprep.subr.mxu0 0.0
        %1679 = vmatpush1.msra.mxu0 0.0
        %1680 = vmatprep.subr.mxu0 0.0
        %1681 = vmatpush1.msra.mxu0 0.0
        %1682 = vmatprep.subr.mxu0 0.0
        %1683 = vmatpush1.msra.mxu0 0.0
        %1684 = vmatprep.subr.mxu0 0.0
        %1685 = vmatpush1.msra.mxu0 0.0
        %1686 = vmatprep.mubr.f32.mxu0 0.0
        %1687 = vmatmul.mubr.f32.gmra.mrb[0].mxu0 %v1588
        %v1688 = vpop.f32.mrb[0].mxu0
        %v1689 = vadd.f32 0.0, %v1688
        %v1690 = vpop.f32.mrb[0].mxu0
        %v1691 = vadd.f32 0.0, %v1690
        %1692 = vdwg.mxu0
        %v1693 = vadd.f32 %v1584, %v1689
        %v1694 = vadd.f32 %v1586, %v1691
        %v1695 = vld [vmem:[%s4] sm:$0x3]
        %v1697 = vlaneseq
        %v1698 = vshrl.u32 %v1697, 7
        %v1699 = vsub.s32 0, %v1698
        %v1700 = vrot.slane %v1695, %v1699
        %v1701 = vlaneseq
        %v1702 = vshrl.u32 %v1701, 7
        %v1703 = vsub.s32 1, %v1702
        %v1704 = vrot.slane %v1695, %v1703
        %v1707 = vadd.f32 %v1693, %v1700
        %v1708 = vadd.f32 %v1694, %v1704
        %v1709 = vmax.f32 %v1707, 0.0
        %v1710 = vmax.f32 %v1708, 0.0
        %v1713 = vcombine.low %v1709, %v1710
        %v1714 = vcombine.high %v1709, %v1710
        %v1718 = vunpack.c.l.s4 1966171168
        %v1719 = vunpack.c.0.s8 %v1718
        %v1720 = vlaneseq
        %v1721 = vshrl.u32 %v1720, 7
        %v1722 = vsub.s32 %v1719, %v1721
        %v1723 = vrot.slane %v1713, %v1722
        %v1725 = vunpack.c.l.s4 1966171168
        %v1726 = vunpack.c.0.s8 %v1725
        %v1727 = vlaneseq
        %v1728 = vshrl.u32 %v1727, 7
        %v1729 = vsub.s32 %v1726, %v1728
        %v1730 = vrot.slane %v1714, %v1729
        %v1733 = vrot.slane %v1723, 4
        %v1734 = vrot.slane %v1730, 4
        %v1737 = vmax.f32 %v1723, %v1733
        %v1738 = vmax.f32 %v1730, %v1734
        %v1741 = vrot.slane %v1737, 2
        %v1742 = vrot.slane %v1738, 2
        %1745 = vrot.lane.b32.xlu0 %v1737, 64
        %v1746 = vpop.permute.xlu0 %1745
        %1747 = vrot.lane.b32.xlu0 %v1738, 64
        %v1748 = vpop.permute.xlu0 %1747
        %v1749 = vrot.slane %v1746, 2
        %v1750 = vrot.slane %v1748, 2
        %v1755 = vcombine.low %v1737, %v1746
        %v1757 = vunpack.c.l.s4 1934713408
        %v1758 = vunpack.c.0.s8 %v1757
        %v1759 = vlaneseq
        %v1760 = vshrl.u32 %v1759, 7
        %v1761 = vsub.s32 %v1758, %v1760
        %v1762 = vrot.slane %v1755, %v1761
        %v1763 = vcombine.high %v1762, 0.0
        %v1764 = vcombine.low %v1741, %v1749
        %v1766 = vunpack.c.l.s4 1934713408
        %v1767 = vunpack.c.0.s8 %v1766
        %v1768 = vlaneseq
        %v1769 = vshrl.u32 %v1768, 7
        %v1770 = vsub.s32 %v1767, %v1769
        %v1771 = vrot.slane %v1764, %v1770
        %v1772 = vcombine.high %v1771, 0.0
        %v1773 = vcombine.low %v1738, %v1748
        %v1775 = vunpack.c.l.s4 1934713408
        %v1776 = vunpack.c.0.s8 %v1775
        %v1777 = vlaneseq
        %v1778 = vshrl.u32 %v1777, 7
        %v1779 = vsub.s32 %v1776, %v1778
        %v1780 = vrot.slane %v1773, %v1779
        %v1781 = vcombine.high %v1780, 0.0
        %v1782 = vcombine.low %v1742, %v1750
        %v1784 = vunpack.c.l.s4 1934713408
        %v1785 = vunpack.c.0.s8 %v1784
        %v1786 = vlaneseq
        %v1787 = vshrl.u32 %v1786, 7
        %v1788 = vsub.s32 %v1785, %v1787
        %v1789 = vrot.slane %v1782, %v1788
        %v1790 = vcombine.high %v1789, 0.0
        %1799 = vrot.lane.b32.xlu0 %v1762, 96
        %v1800 = vpop.permute.xlu0 %1799
        %1801 = vrot.lane.b32.xlu0 %v1771, 96
        %v1802 = vpop.permute.xlu0 %1801
        %1803 = vrot.lane.b32.xlu0 %v1763, 96
        %v1804 = vpop.permute.xlu0 %1803
        %1805 = vrot.lane.b32.xlu0 %v1772, 96
        %v1806 = vpop.permute.xlu0 %1805
        %1807 = vrot.lane.b32.xlu0 %v1780, 96
        %v1808 = vpop.permute.xlu0 %1807
        %1809 = vrot.lane.b32.xlu0 %v1789, 96
        %v1810 = vpop.permute.xlu0 %1809
        %1811 = vrot.lane.b32.xlu0 %v1781, 96
        %v1812 = vpop.permute.xlu0 %1811
        %1813 = vrot.lane.b32.xlu0 %v1790, 96
        %v1814 = vpop.permute.xlu0 %1813
        %v1823 = vmax.f32 %v1762, %v1800
        %v1824 = vmax.f32 %v1771, %v1802
        %v1825 = vmax.f32 %v1763, %v1804
        %v1826 = vmax.f32 %v1772, %v1806
        %v1827 = vmax.f32 %v1780, %v1808
        %v1828 = vmax.f32 %v1789, %v1810
        %v1829 = vmax.f32 %v1781, %v1812
        %v1830 = vmax.f32 %v1790, %v1814
        %v1831 = vcombine.low %v1823, %v1825
        %v1833 = vunpack.c.l.s4 1934713408
        %v1834 = vunpack.c.0.s8 %v1833
        %v1835 = vlaneseq
        %v1836 = vshrl.u32 %v1835, 7
        %v1837 = vsub.s32 %v1834, %v1836
        %v1838 = vrot.slane %v1831, %v1837
        %v1839 = vcombine.high %v1838, 0.0
        %v1840 = vcombine.low %v1827, %v1829
        %v1842 = vunpack.c.l.s4 1934713408
        %v1843 = vunpack.c.0.s8 %v1842
        %v1844 = vlaneseq
        %v1845 = vshrl.u32 %v1844, 7
        %v1846 = vsub.s32 %v1843, %v1845
        %v1847 = vrot.slane %v1840, %v1846
        %v1848 = vcombine.high %v1847, 0.0
        %v1849 = vcombine.low %v1824, %v1826
        %v1851 = vunpack.c.l.s4 1934713408
        %v1852 = vunpack.c.0.s8 %v1851
        %v1853 = vlaneseq
        %v1854 = vshrl.u32 %v1853, 7
        %v1855 = vsub.s32 %v1852, %v1854
        %v1856 = vrot.slane %v1849, %v1855
        %v1857 = vcombine.high %v1856, 0.0
        %v1858 = vcombine.low %v1828, %v1830
        %v1860 = vunpack.c.l.s4 1934713408
        %v1861 = vunpack.c.0.s8 %v1860
        %v1862 = vlaneseq
        %v1863 = vshrl.u32 %v1862, 7
        %v1864 = vsub.s32 %v1861, %v1863
        %v1865 = vrot.slane %v1858, %v1864
        %v1866 = vcombine.high %v1865, 0.0
        %v1869 = vcombine.low %v1838, %v1847
        %v1871 = vunpack.c.l.s4 1983009808
        %v1872 = vunpack.c.0.s8 %v1871
        %v1873 = vlaneseq
        %v1874 = vshrl.u32 %v1873, 7
        %v1875 = vsub.s32 %v1872, %v1874
        %v1876 = vrot.slane %v1869, %v1875
        %v1880 = vcombine.low %v1839, %v1848
        %v1882 = vunpack.c.l.s4 1983009808
        %v1883 = vunpack.c.0.s8 %v1882
        %v1884 = vlaneseq
        %v1885 = vshrl.u32 %v1884, 7
        %v1886 = vsub.s32 %v1883, %v1885
        %v1887 = vrot.slane %v1880, %v1886
        %1888 = vrot.lane.b32.xlu0 %v1887, 32
        %v1889 = vpop.permute.xlu0 %1888
        %v1893 = vcombine.low %v1856, %v1865
        %v1895 = vunpack.c.l.s4 1983009808
        %v1896 = vunpack.c.0.s8 %v1895
        %v1897 = vlaneseq
        %v1898 = vshrl.u32 %v1897, 7
        %v1899 = vsub.s32 %v1896, %v1898
        %v1900 = vrot.slane %v1893, %v1899
        %1901 = vrot.lane.b32.xlu0 %v1900, 64
        %v1902 = vpop.permute.xlu0 %1901
        %v1906 = vcombine.low %v1857, %v1866
        %v1908 = vunpack.c.l.s4 1983009808
        %v1909 = vunpack.c.0.s8 %v1908
        %v1910 = vlaneseq
        %v1911 = vshrl.u32 %v1910, 7
        %v1912 = vsub.s32 %v1909, %v1911
        %v1913 = vrot.slane %v1906, %v1912
        %1914 = vrot.lane.b32.xlu0 %v1913, 96
        %v1915 = vpop.permute.xlu0 %1914
        %v1917 = vsel %vm1367, %v1876, %v1889
        %v1918 = vsel %vm1370, %v1917, %v1902
        %v1919 = vsel %vm1374, %v1918, %v1915
        %1920 = vst [vmem:[%s271] sm:$0xf] %v1919
        %s1921 = sand.u32 %s141, 1
        %s1922 = scalar_lea.sflag [#allocation6], %s1921
        %s1923 = sand.u32 %s141, 1
        %s1924 = smul.addr %s1923, 4
        %s1925 = scalar_lea.vmem [#allocation10], %s1924
        // Predicated region
        $region53: #{tpu_custom_call.1} parent=39 // pred_check
          %p1926 = pneg %p151
        $region54: #{tpu_custom_call.1} parent=39 // pred_check_branch
          %1928 = sbr.rel (%p1926) target = $region56
        $region55: #{tpu_custom_call.1} parent=39 // pred_region
          %s1930 = ssub.s32 64, 64
          %1931 = vsyncadd %s1922, %s1930
          %s1932 = smul.addr %s23, 64
          %s1933 = scalar_lea.hbm %s5, %s1932
          %s1935 = sshll.u32 %s1925, 4
          %s1936 = int_to_ptr.vmem [resolvable:$true] %s1935
          %1938 = dma.vmem_to_hbm [thread:$0]  %s1936, 64, %s1933, %s1922
        $region56: #{tpu_custom_call.1} parent=39 // pred_fallthru
          _
      $region40: #{tpu_custom_call.1} parent=5 // pred_fallthru
        _
      %p1939 = scmp.le.s32.totalorder 2, %s18
      // Predicated region
      $region57: #{tpu_custom_call.1} parent=5 // pred_check
        %p1940 = pneg %p1939
      $region58: #{tpu_custom_call.1} parent=5 // pred_check_branch
        %1942 = sbr.rel (%p1940) target = $region60
      $region59: #{tpu_custom_call.1} parent=5 // pred_region
        %s1943 = ssub.s32 %s18, 2
        // Predicated region
        $region61: #{tpu_custom_call.1} parent=59 // pred_check
          %p1944 = pneg %p157
        $region62: #{tpu_custom_call.1} parent=59 // pred_check_branch
          %1946 = sbr.rel (%p1944) target = $region64
        $region63: #{tpu_custom_call.1} parent=59 // pred_region
          %s1947 = sand.u32 %s142, 1
          %s1948 = scalar_lea.sflag [#allocation6], %s1947
          %s1949 = sand.u32 %s142, 1
          %s1950 = smul.addr %s1949, 4
          %s1951 = scalar_lea.vmem [#allocation10], %s1950
          %1952 = dma.done %s1948, 64
        $region64: #{tpu_custom_call.1} parent=59 // pred_fallthru
          _
      $region60: #{tpu_custom_call.1} parent=5 // pred_fallthru
        _
    $region6: #{tpu_custom_call.1} parent=1 // loop_footer
      %s22 = sadd.s32 1, %s18
    $region7: #{tpu_custom_call.1} parent=1 // loop_footer_branch
      %17 = sbr.rel target = $region3
    $region8: #{tpu_custom_call.1} parent=1 // loop_exit
      _
    %1953 = vsyncpa [#allocation5], 1
    %s1954 = scalar_lea.sflag [#allocation5], 1
    %1955 = vsyncpa %s1954, 1
    %1956 = vsyncpa [#allocation8], 1
    %1957 = vsyncpa [#allocation6], 1
    %s1958 = scalar_lea.sflag [#allocation6], 1
    %1959 = vsyncpa %s1958, 1

</llo_original>
